<compile_context>
chip_gen: v7x
topology: tpu7x:2x2x1
jax: 0.10.0
libtpu: 0.0.40
codegen_flags: <defaults>
</compile_context>

<pallas_src>
import math

import jax
import jax.numpy as jnp
from jax import lax
from jax.experimental import pallas as pl
from jax.experimental.pallas import tpu as pltpu

# ---- PatchTST hyper-parameters (module defaults) + demo input size ----
SEQ_LEN = 32                 # input sequence length
N_VARS = 4                   # number of variables / channels
PATCH_LEN = 16
STRIDE = 8
PAD = STRIDE                 # ReplicationPad1d((0, padding)), padding = stride
NUM_PATCHES = (SEQ_LEN + PAD - PATCH_LEN) // STRIDE + 1     # = 4
HIDDEN = 32                  # d_model
NUM_HEADS = 4
HEAD_DIM = HIDDEN // NUM_HEADS
FF_DIM = HIDDEN * 4
LN_EPS = 1e-5

# consistency with PatchTST.head_nf = d_model * int((seq_len - patch_len)/stride + 2)
assert NUM_PATCHES == int((SEQ_LEN - PATCH_LEN) / STRIDE + 2)


def _layernorm(h, gamma, beta):
    mu = jnp.mean(h, axis=-1, keepdims=True)
    var = jnp.mean((h - mu) * (h - mu), axis=-1, keepdims=True)
    return (h - mu) * lax.rsqrt(var + LN_EPS) * gamma + beta


def patchtst_kernel(
    patches_ref,                 # (TB, V, P, L)
    pe_ref,                      # (P, H)    sinusoidal positional encoding (buffer)
    hm_ref,                      # (H, H)    constant block-diagonal head mask
    w_emb_ref,                   # (L, H)    value embedding (bias-free)
    w_qkv_ref, b_qkv_ref,        # (H, 3H), (1, 3H)   fused in-projection (q|k|v cols)
    w_out_ref, b_out_ref,        # (H, H), (1, H)     attention out-projection
    g1_ref, be1_ref,             # (1, H)             LayerNorm1
    w_ff1_ref, b_ff1_ref,        # (H, FF), (1, FF)
    w_ff2_ref, b_ff2_ref,        # (FF, H), (1, H)
    g2_ref, be2_ref,             # (1, H)             LayerNorm2
    w_proj_ref, b_proj_ref,      # (V*P, H), (1, 1)   projection head
    o_ref,                       # (TB, 1)
):
    TB, V, P, L = patches_ref.shape
    H = HIDDEN
    N = TB * V                   # independent sequences in this batch block
    R = N * P                    # total patch rows
    scale = 1.0 / math.sqrt(HEAD_DIM)

    # ---- PatchEmbedding: value embedding + positional encoding ----
    p2 = patches_ref[...].astype(jnp.float32).reshape(R, L)
    e = jnp.dot(p2, w_emb_ref[...], preferred_element_type=jnp.float32)          # (R, H)
    e = (e.reshape(N, P, H) + pe_ref[...][None, :, :]).reshape(R, H)

    # ---- multi-head self-attention (batch_first, no mask), fused QKV ----
    qkv = jnp.dot(e, w_qkv_ref[...], preferred_element_type=jnp.float32) + b_qkv_ref[...]
    q = qkv[:, 0 * H:1 * H].reshape(N, P, H)
    k = qkv[:, 1 * H:2 * H].reshape(N, P, H)
    v = qkv[:, 2 * H:3 * H].reshape(N, P, H)

    # per-head scores while keeping heads packed in the 32-wide lane dim:
    #   prod[n,i,j,c]      = q[n,i,c] * k[n,j,c]
    #   scores[n,i,j,c]    = sum_{c' in head(c)} prod[n,i,j,c']
    # The (H, H) block-diagonal ones matrix does the within-head reduction AND the
    # broadcast back over that head's lanes in a single MXU pass, so every
    # softmax intermediate stays lane-dense (32 lanes), no lane slicing needed.
    prod = q[:, :, None, :] * k[:, None, :, :]                                    # (N,P,P,H)
    scores = jnp.dot(prod.reshape(N * P * P, H), hm_ref[...],
                     preferred_element_type=jnp.float32).reshape(N, P, P, H) * scale
    # softmax over the key axis (values are identical across a head's lanes, so
    # per-lane softmax == per-head softmax); divide goes to the EUP
    m = jnp.max(scores, axis=2, keepdims=True)
    ex = jnp.exp(scores - m)
    den = jnp.sum(ex, axis=2, keepdims=True)
    probs = ex * pl.reciprocal(den, approx=True)                                  # (N,P,P,H)
    ctx = jnp.sum(probs * v[:, None, :, :], axis=2)                               # (N,P,H)
    attn = jnp.dot(ctx.reshape(R, H), w_out_ref[...],
                   preferred_element_type=jnp.float32) + b_out_ref[...]

    # ---- residual + post-norm, ReLU FFN, residual + post-norm ----
    h1 = _layernorm(e + attn, g1_ref[...], be1_ref[...])                          # (R, H)
    ff = jnp.maximum(
        jnp.dot(h1, w_ff1_ref[...], preferred_element_type=jnp.float32) + b_ff1_ref[...], 0.0)
    ff = jnp.dot(ff, w_ff2_ref[...], preferred_element_type=jnp.float32) + b_ff2_ref[...]
    h2 = _layernorm(h1 + ff, g2_ref[...], be2_ref[...])                           # (R, H)

    # ---- flatten + projection + sigmoid: one fused reduction, one store ----
    # row-major flatten over (V, P, H) per batch element matches torch reshape(bs, -1)
    prod_o = h2.reshape(TB, V * P, H) * w_proj_ref[...][None, :, :]
    logits = jnp.sum(jnp.sum(prod_o, axis=-1), axis=-1, keepdims=True)            # (TB, 1)
    o_ref[...] = jax.nn.sigmoid(logits + b_proj_ref[...])


def _positional_encoding(num_pos, d_model):
    position = jnp.arange(num_pos, dtype=jnp.float32)[:, None]
    div_term = jnp.exp(jnp.arange(0, d_model, 2, dtype=jnp.float32)
                       * -(math.log(10000.0) / d_model))
    pe = jnp.zeros((num_pos, d_model), jnp.float32)
    pe = pe.at[:, 0::2].set(jnp.sin(position * div_term))
    pe = pe.at[:, 1::2].set(jnp.cos(position * div_term))
    return pe


def _patchify(x):
    """(B, S, V) -> (B, V, P, L): permute, replication-pad right, unfold (pure indexing)."""
    xt = jnp.transpose(x, (0, 2, 1))                                              # (B, V, S)
    xp = jnp.concatenate([xt, jnp.repeat(xt[:, :, -1:], PAD, axis=-1)], axis=-1)  # (B, V, S+PAD)
    patches = jnp.stack(
        [lax.slice_in_dim(xp, p * STRIDE, p * STRIDE + PATCH_LEN, axis=2)
         for p in range(NUM_PATCHES)],
        axis=2)                                                                   # (B, V, P, L)
    return patches


@jax.jit
def patchtst_forward(x, params):
    B = x.shape[0]
    patches = _patchify(x).astype(jnp.float32)          # (B, V, P, L)

    # Batch block: whole batch when small; otherwise the largest sublane-aligned
    # chunk (<=64) dividing B, to amortize per-grid-step overhead while keeping the
    # (TB, 1) output block legal and letting v7x shard the grid across both TCs.
    if B <= 64:
        TB = B
    else:
        TB = next((t for t in (64, 32, 16, 8) if B % t == 0), B)
    assert B % TB == 0
    grid = (B // TB,)

    V, P, L, H, FF = N_VARS, NUM_PATCHES, PATCH_LEN, HIDDEN, FF_DIM

    def resident(shape):
        # full-array block, constant index_map -> fetched once, stays in VMEM
        return pl.BlockSpec(shape, lambda i, _n=len(shape): (0,) * _n)

    in_specs = [
        pl.BlockSpec((TB, V, P, L), lambda i: (i, 0, 0, 0)),   # patches (blocked over batch)
        resident((P, H)),                                      # pe
        resident((H, H)),                                      # head mask
        resident((L, H)),                                      # w_emb
        resident((H, 3 * H)), resident((1, 3 * H)),            # w_qkv, b_qkv
        resident((H, H)), resident((1, H)),                    # w_out, b_out
        resident((1, H)), resident((1, H)),                    # g1, be1
        resident((H, FF)), resident((1, FF)),                  # w_ff1, b_ff1
        resident((FF, H)), resident((1, H)),                   # w_ff2, b_ff2
        resident((1, H)), resident((1, H)),                    # g2, be2
        resident((V * P, H)), resident((1, 1)),                # w_proj, b_proj
    ]
    out_specs = pl.BlockSpec((TB, 1), lambda i: (i, 0))

    args = (
        patches,
        params["pe"], params["head_mask"],
        params["w_emb"],
        params["w_qkv"], params["b_qkv"],
        params["w_out"], params["b_out"],
        params["g1"], params["be1"],
        params["w_ff1"], params["b_ff1"],
        params["w_ff2"], params["b_ff2"],
        params["g2"], params["be2"],
        params["w_proj"], params["b_proj"],
    )

    return pl.pallas_call(
        patchtst_kernel,
        out_shape=jax.ShapeDtypeStruct((B, 1), jnp.float32),
        grid=grid,
        in_specs=in_specs,
        out_specs=out_specs,
        compiler_params=pltpu.CompilerParams(
            dimension_semantics=("parallel",),
            vmem_limit_bytes=32 * 1024 * 1024,
        ),
    )(*args)


def init_params(key):
    """Deterministic synthetic init (PyTorch-style U(-1/sqrt(fan_in), +1/sqrt(fan_in))).
    Weights are stored pre-transposed to (in_features, out_features); a real checkpoint's
    in_proj_weight (3H, H) must be transposed keeping the [q; k; v] block order."""
    ks = jax.random.split(key, 11)

    def u(k, fan_in, shape):
        b = 1.0 / math.sqrt(fan_in)
        return jax.random.uniform(k, shape, jnp.float32, -b, b)

    H, L, FF, V, P = HIDDEN, PATCH_LEN, FF_DIM, N_VARS, NUM_PATCHES
    head_of = jnp.arange(H) // HEAD_DIM
    head_mask = (head_of[:, None] == head_of[None, :]).astype(jnp.float32)   # (H, H)

    return {
        # fixed buffers / constants
        "pe": _positional_encoding(P, H),
        "head_mask": head_mask,        # block-diagonal ones: within-head reduce + broadcast
        # PatchEmbedding.value_embedding: Linear(patch_len, d_model, bias=False)
        "w_emb": u(ks[0], L, (L, H)),
        # MHA fused in-projection + out-projection
        "w_qkv": u(ks[1], H, (H, 3 * H)),
        "b_qkv": u(ks[2], H, (1, 3 * H)),
        "w_out": u(ks[3], H, (H, H)),
        "b_out": u(ks[4], H, (1, H)),
        # LayerNorms
        "g1": jnp.ones((1, H), jnp.float32), "be1": jnp.zeros((1, H), jnp.float32),
        "g2": jnp.ones((1, H), jnp.float32), "be2": jnp.zeros((1, H), jnp.float32),
        # feed-forward
        "w_ff1": u(ks[5], H, (H, FF)), "b_ff1": u(ks[6], H, (1, FF)),
        "w_ff2": u(ks[7], FF, (FF, H)), "b_ff2": u(ks[8], FF, (1, H)),
        # projection Linear(V*P*H, 1): weight reshaped row-major to (V*P, H) so the
        # in-kernel elementwise-multiply + sum matches torch's reshape(bs, -1) @ W.T
        "w_proj": u(ks[9], V * P * H, (V * P, H)),
        "b_proj": u(ks[10], V * P * H, (1, 1)),
    }


if __name__ == "__main__":
    key = jax.random.PRNGKey(0)
    k_x, k_p = jax.random.split(key)

    B = 2
    x = jax.random.normal(k_x, (B, SEQ_LEN, N_VARS), jnp.float32)   # (batch, seq_len, n_vars)
    params = init_params(k_p)

    out = patchtst_forward(x, params)
    out = jax.block_until_ready(out)

    assert out.shape == (B, 1), out.shape
    assert bool(jnp.all(jnp.isfinite(out)))
    assert bool(jnp.all((out >= 0.0) & (out <= 1.0)))
    print("KERNEL_OK")
</pallas_src>

<mosaic_0001>
module attributes {stable_mosaic.version = 11 : i64} {
  func.func @patchtst_kernel(%arg0: i32, %arg1: memref<2x4x4x16xf32, #tpu.memory_space<vmem>>, %arg2: memref<4x32xf32, #tpu.memory_space<vmem>>, %arg3: memref<32x32xf32, #tpu.memory_space<vmem>>, %arg4: memref<16x32xf32, #tpu.memory_space<vmem>>, %arg5: memref<32x96xf32, #tpu.memory_space<vmem>>, %arg6: memref<1x96xf32, #tpu.memory_space<vmem>>, %arg7: memref<32x32xf32, #tpu.memory_space<vmem>>, %arg8: memref<1x32xf32, #tpu.memory_space<vmem>>, %arg9: memref<1x32xf32, #tpu.memory_space<vmem>>, %arg10: memref<1x32xf32, #tpu.memory_space<vmem>>, %arg11: memref<32x128xf32, #tpu.memory_space<vmem>>, %arg12: memref<1x128xf32, #tpu.memory_space<vmem>>, %arg13: memref<128x32xf32, #tpu.memory_space<vmem>>, %arg14: memref<1x32xf32, #tpu.memory_space<vmem>>, %arg15: memref<1x32xf32, #tpu.memory_space<vmem>>, %arg16: memref<1x32xf32, #tpu.memory_space<vmem>>, %arg17: memref<16x32xf32, #tpu.memory_space<vmem>>, %arg18: memref<1x1xf32, #tpu.memory_space<vmem>>, %arg19: memref<2x1xf32, #tpu.memory_space<vmem>>) attributes {dimension_semantics = [#tpu.dimension_semantics<parallel>], iteration_bounds = array<i64: 1>, scalar_prefetch = 0 : i64, scratch_operands = 0 : i64, tpu.core_type = #tpu.core_type<tc>, window_params = [{transform_indices = @transform_0, window_bounds = array<i64: 2, 4, 4, 16>}, {pipeline_mode = #tpu.pipeline_mode<synchronous>, transform_indices = @transform_1, window_bounds = array<i64: 4, 32>}, {pipeline_mode = #tpu.pipeline_mode<synchronous>, transform_indices = @transform_2, window_bounds = array<i64: 32, 32>}, {pipeline_mode = #tpu.pipeline_mode<synchronous>, transform_indices = @transform_3, window_bounds = array<i64: 16, 32>}, {pipeline_mode = #tpu.pipeline_mode<synchronous>, transform_indices = @transform_4, window_bounds = array<i64: 32, 96>}, {pipeline_mode = #tpu.pipeline_mode<synchronous>, transform_indices = @transform_5, window_bounds = array<i64: 1, 96>}, {pipeline_mode = #tpu.pipeline_mode<synchronous>, transform_indices = @transform_6, window_bounds = array<i64: 32, 32>}, {pipeline_mode = #tpu.pipeline_mode<synchronous>, transform_indices = @transform_7, window_bounds = array<i64: 1, 32>}, {pipeline_mode = #tpu.pipeline_mode<synchronous>, transform_indices = @transform_8, window_bounds = array<i64: 1, 32>}, {pipeline_mode = #tpu.pipeline_mode<synchronous>, transform_indices = @transform_9, window_bounds = array<i64: 1, 32>}, {pipeline_mode = #tpu.pipeline_mode<synchronous>, transform_indices = @transform_10, window_bounds = array<i64: 32, 128>}, {pipeline_mode = #tpu.pipeline_mode<synchronous>, transform_indices = @transform_11, window_bounds = array<i64: 1, 128>}, {pipeline_mode = #tpu.pipeline_mode<synchronous>, transform_indices = @transform_12, window_bounds = array<i64: 128, 32>}, {pipeline_mode = #tpu.pipeline_mode<synchronous>, transform_indices = @transform_13, window_bounds = array<i64: 1, 32>}, {pipeline_mode = #tpu.pipeline_mode<synchronous>, transform_indices = @transform_14, window_bounds = array<i64: 1, 32>}, {pipeline_mode = #tpu.pipeline_mode<synchronous>, transform_indices = @transform_15, window_bounds = array<i64: 1, 32>}, {pipeline_mode = #tpu.pipeline_mode<synchronous>, transform_indices = @transform_16, window_bounds = array<i64: 16, 32>}, {pipeline_mode = #tpu.pipeline_mode<synchronous>, transform_indices = @transform_17, window_bounds = array<i64: 1, 1>}, {transform_indices = @transform_18, window_bounds = array<i64: 2, 1>}]} {
    %c0 = arith.constant 0 : index
    %c0_0 = arith.constant 0 : index
    %c0_1 = arith.constant 0 : index
    %c0_2 = arith.constant 0 : index
    %0 = vector.load %arg1[%c0, %c0_0, %c0_1, %c0_2] : memref<2x4x4x16xf32, #tpu.memory_space<vmem>>, vector<2x4x4x16xf32>
    %1 = vector.shape_cast %0 : vector<2x4x4x16xf32> to vector<32x16xf32>
    %c0_3 = arith.constant 0 : index
    %c0_4 = arith.constant 0 : index
    %2 = vector.load %arg4[%c0_3, %c0_4] : memref<16x32xf32, #tpu.memory_space<vmem>>, vector<16x32xf32>
    %cst = arith.constant dense<0.000000e+00> : vector<32x32xf32>
    %3 = tpu.matmul %1, %2, %cst {dimension_numbers = #tpu.dot_dimension_numbers<[1], [0], [0], [1], [0, 0, 1, 1], [], []>} : vector<32x16xf32>, vector<16x32xf32>, vector<32x32xf32> -> vector<32x32xf32>
    %4 = vector.shape_cast %3 : vector<32x32xf32> to vector<8x4x32xf32>
    %c0_5 = arith.constant 0 : index
    %c0_6 = arith.constant 0 : index
    %5 = vector.load %arg2[%c0_5, %c0_6] : memref<4x32xf32, #tpu.memory_space<vmem>>, vector<4x32xf32>
    %6 = vector.shape_cast %5 : vector<4x32xf32> to vector<1x4x32xf32>
    %7 = vector.broadcast %6 : vector<1x4x32xf32> to vector<8x4x32xf32>
    %8 = arith.addf %4, %7 : vector<8x4x32xf32>
    %9 = vector.shape_cast %8 : vector<8x4x32xf32> to vector<32x32xf32>
    %c0_7 = arith.constant 0 : index
    %c0_8 = arith.constant 0 : index
    %10 = vector.load %arg5[%c0_7, %c0_8] : memref<32x96xf32, #tpu.memory_space<vmem>>, vector<32x96xf32>
    %cst_9 = arith.constant dense<0.000000e+00> : vector<32x96xf32>
    %11 = tpu.matmul %9, %10, %cst_9 {dimension_numbers = #tpu.dot_dimension_numbers<[1], [0], [0], [1], [0, 0, 1, 1], [], []>} : vector<32x32xf32>, vector<32x96xf32>, vector<32x96xf32> -> vector<32x96xf32>
    %c0_10 = arith.constant 0 : index
    %c0_11 = arith.constant 0 : index
    %12 = vector.load %arg6[%c0_10, %c0_11] : memref<1x96xf32, #tpu.memory_space<vmem>>, vector<1x96xf32>
    %13 = vector.broadcast %12 : vector<1x96xf32> to vector<32x96xf32>
    %14 = arith.addf %11, %13 : vector<32x96xf32>
    %15 = vector.extract_strided_slice %14 {offsets = [0, 0], sizes = [32, 32], strides = [1, 1]} : vector<32x96xf32> to vector<32x32xf32>
    %16 = vector.shape_cast %15 : vector<32x32xf32> to vector<8x4x32xf32>
    %17 = vector.extract_strided_slice %14 {offsets = [0, 32], sizes = [32, 32], strides = [1, 1]} : vector<32x96xf32> to vector<32x32xf32>
    %18 = vector.shape_cast %17 : vector<32x32xf32> to vector<8x4x32xf32>
    %19 = vector.extract_strided_slice %14 {offsets = [0, 64], sizes = [32, 32], strides = [1, 1]} : vector<32x96xf32> to vector<32x32xf32>
    %20 = vector.shape_cast %19 : vector<32x32xf32> to vector<8x4x32xf32>
    %21 = vector.shape_cast %16 : vector<8x4x32xf32> to vector<8x4x1x32xf32>
    %22 = vector.shape_cast %18 : vector<8x4x32xf32> to vector<8x1x4x32xf32>
    %23 = vector.broadcast %21 : vector<8x4x1x32xf32> to vector<8x4x4x32xf32>
    %24 = vector.broadcast %22 : vector<8x1x4x32xf32> to vector<8x4x4x32xf32>
    %25 = arith.mulf %23, %24 : vector<8x4x4x32xf32>
    %26 = vector.shape_cast %25 : vector<8x4x4x32xf32> to vector<128x32xf32>
    %c0_12 = arith.constant 0 : index
    %c0_13 = arith.constant 0 : index
    %27 = vector.load %arg3[%c0_12, %c0_13] : memref<32x32xf32, #tpu.memory_space<vmem>>, vector<32x32xf32>
    %cst_14 = arith.constant dense<0.000000e+00> : vector<128x32xf32>
    %28 = tpu.matmul %26, %27, %cst_14 {dimension_numbers = #tpu.dot_dimension_numbers<[1], [0], [0], [1], [0, 0, 1, 1], [], []>} : vector<128x32xf32>, vector<32x32xf32>, vector<128x32xf32> -> vector<128x32xf32>
    %29 = vector.shape_cast %28 : vector<128x32xf32> to vector<8x4x4x32xf32>
    %cst_15 = arith.constant 0.353553385 : f32
    %30 = vector.broadcast %cst_15 : f32 to vector<8x4x4x32xf32>
    %31 = arith.mulf %29, %30 : vector<8x4x4x32xf32>
    %cst_16 = arith.constant dense<0xFF800000> : vector<8x4x32xf32>
    %32 = vector.multi_reduction <maximumf>, %31, %cst_16 [2] : vector<8x4x4x32xf32> to vector<8x4x32xf32>
    %33 = vector.shape_cast %32 : vector<8x4x32xf32> to vector<8x4x1x32xf32>
    %34 = vector.broadcast %33 : vector<8x4x1x32xf32> to vector<8x4x4x32xf32>
    %35 = arith.subf %31, %34 : vector<8x4x4x32xf32>
    %36 = math.exp %35 : vector<8x4x4x32xf32>
    %cst_17 = arith.constant dense<0.000000e+00> : vector<8x4x32xf32>
    %37 = vector.multi_reduction <add>, %36, %cst_17 [2] : vector<8x4x4x32xf32> to vector<8x4x32xf32>
    %38 = vector.shape_cast %37 : vector<8x4x32xf32> to vector<8x4x1x32xf32>
    %39 = tpu.reciprocal %38 {approx = true} : vector<8x4x1x32xf32> -> vector<8x4x1x32xf32>
    %40 = vector.broadcast %39 : vector<8x4x1x32xf32> to vector<8x4x4x32xf32>
    %41 = arith.mulf %36, %40 : vector<8x4x4x32xf32>
    %42 = vector.shape_cast %20 : vector<8x4x32xf32> to vector<8x1x4x32xf32>
    %43 = vector.broadcast %42 : vector<8x1x4x32xf32> to vector<8x4x4x32xf32>
    %44 = arith.mulf %41, %43 : vector<8x4x4x32xf32>
    %cst_18 = arith.constant dense<0.000000e+00> : vector<8x4x32xf32>
    %45 = vector.multi_reduction <add>, %44, %cst_18 [2] : vector<8x4x4x32xf32> to vector<8x4x32xf32>
    %46 = vector.shape_cast %45 : vector<8x4x32xf32> to vector<32x32xf32>
    %c0_19 = arith.constant 0 : index
    %c0_20 = arith.constant 0 : index
    %47 = vector.load %arg7[%c0_19, %c0_20] : memref<32x32xf32, #tpu.memory_space<vmem>>, vector<32x32xf32>
    %cst_21 = arith.constant dense<0.000000e+00> : vector<32x32xf32>
    %48 = tpu.matmul %46, %47, %cst_21 {dimension_numbers = #tpu.dot_dimension_numbers<[1], [0], [0], [1], [0, 0, 1, 1], [], []>} : vector<32x32xf32>, vector<32x32xf32>, vector<32x32xf32> -> vector<32x32xf32>
    %c0_22 = arith.constant 0 : index
    %c0_23 = arith.constant 0 : index
    %49 = vector.load %arg8[%c0_22, %c0_23] : memref<1x32xf32, #tpu.memory_space<vmem>>, vector<1x32xf32>
    %50 = vector.broadcast %49 : vector<1x32xf32> to vector<32x32xf32>
    %51 = arith.addf %48, %50 : vector<32x32xf32>
    %52 = arith.addf %9, %51 : vector<32x32xf32>
    %c0_24 = arith.constant 0 : index
    %c0_25 = arith.constant 0 : index
    %53 = vector.load %arg9[%c0_24, %c0_25] : memref<1x32xf32, #tpu.memory_space<vmem>>, vector<1x32xf32>
    %c0_26 = arith.constant 0 : index
    %c0_27 = arith.constant 0 : index
    %54 = vector.load %arg10[%c0_26, %c0_27] : memref<1x32xf32, #tpu.memory_space<vmem>>, vector<1x32xf32>
    %cst_28 = arith.constant dense<0.000000e+00> : vector<32xf32>
    %55 = vector.multi_reduction <add>, %52, %cst_28 [1] : vector<32x32xf32> to vector<32xf32>
    %56 = vector.shape_cast %55 : vector<32xf32> to vector<32x1xf32>
    %cst_29 = arith.constant 3.200000e+01 : f32
    %57 = vector.broadcast %cst_29 : f32 to vector<32x1xf32>
    %58 = arith.divf %56, %57 : vector<32x1xf32>
    %59 = vector.broadcast %58 : vector<32x1xf32> to vector<32x32xf32>
    %60 = arith.subf %52, %59 : vector<32x32xf32>
    %61 = vector.broadcast %58 : vector<32x1xf32> to vector<32x32xf32>
    %62 = arith.subf %52, %61 : vector<32x32xf32>
    %63 = arith.mulf %60, %62 : vector<32x32xf32>
    %cst_30 = arith.constant dense<0.000000e+00> : vector<32xf32>
    %64 = vector.multi_reduction <add>, %63, %cst_30 [1] : vector<32x32xf32> to vector<32xf32>
    %65 = vector.shape_cast %64 : vector<32xf32> to vector<32x1xf32>
    %cst_31 = arith.constant 3.200000e+01 : f32
    %66 = vector.broadcast %cst_31 : f32 to vector<32x1xf32>
    %67 = arith.divf %65, %66 : vector<32x1xf32>
    %68 = vector.broadcast %58 : vector<32x1xf32> to vector<32x32xf32>
    %69 = arith.subf %52, %68 : vector<32x32xf32>
    %cst_32 = arith.constant 9.99999974E-6 : f32
    %70 = vector.broadcast %cst_32 : f32 to vector<32x1xf32>
    %71 = arith.addf %67, %70 : vector<32x1xf32>
    %72 = math.rsqrt %71 : vector<32x1xf32>
    %73 = vector.broadcast %72 : vector<32x1xf32> to vector<32x32xf32>
    %74 = arith.mulf %69, %73 : vector<32x32xf32>
    %75 = vector.broadcast %53 : vector<1x32xf32> to vector<32x32xf32>
    %76 = arith.mulf %74, %75 : vector<32x32xf32>
    %77 = vector.broadcast %54 : vector<1x32xf32> to vector<32x32xf32>
    %78 = arith.addf %76, %77 : vector<32x32xf32>
    %c0_33 = arith.constant 0 : index
    %c0_34 = arith.constant 0 : index
    %79 = vector.load %arg11[%c0_33, %c0_34] : memref<32x128xf32, #tpu.memory_space<vmem>>, vector<32x128xf32>
    %cst_35 = arith.constant dense<0.000000e+00> : vector<32x128xf32>
    %80 = tpu.matmul %78, %79, %cst_35 {dimension_numbers = #tpu.dot_dimension_numbers<[1], [0], [0], [1], [0, 0, 1, 1], [], []>} : vector<32x32xf32>, vector<32x128xf32>, vector<32x128xf32> -> vector<32x128xf32>
    %c0_36 = arith.constant 0 : index
    %c0_37 = arith.constant 0 : index
    %81 = vector.load %arg12[%c0_36, %c0_37] : memref<1x128xf32, #tpu.memory_space<vmem>>, vector<1x128xf32>
    %82 = vector.broadcast %81 : vector<1x128xf32> to vector<32x128xf32>
    %83 = arith.addf %80, %82 : vector<32x128xf32>
    %cst_38 = arith.constant 0.000000e+00 : f32
    %84 = vector.broadcast %cst_38 : f32 to vector<32x128xf32>
    %85 = arith.maximumf %83, %84 : vector<32x128xf32>
    %c0_39 = arith.constant 0 : index
    %c0_40 = arith.constant 0 : index
    %86 = vector.load %arg13[%c0_39, %c0_40] : memref<128x32xf32, #tpu.memory_space<vmem>>, vector<128x32xf32>
    %cst_41 = arith.constant dense<0.000000e+00> : vector<32x32xf32>
    %87 = tpu.matmul %85, %86, %cst_41 {dimension_numbers = #tpu.dot_dimension_numbers<[1], [0], [0], [1], [0, 0, 1, 1], [], []>} : vector<32x128xf32>, vector<128x32xf32>, vector<32x32xf32> -> vector<32x32xf32>
    %c0_42 = arith.constant 0 : index
    %c0_43 = arith.constant 0 : index
    %88 = vector.load %arg14[%c0_42, %c0_43] : memref<1x32xf32, #tpu.memory_space<vmem>>, vector<1x32xf32>
    %89 = vector.broadcast %88 : vector<1x32xf32> to vector<32x32xf32>
    %90 = arith.addf %87, %89 : vector<32x32xf32>
    %91 = arith.addf %78, %90 : vector<32x32xf32>
    %c0_44 = arith.constant 0 : index
    %c0_45 = arith.constant 0 : index
    %92 = vector.load %arg15[%c0_44, %c0_45] : memref<1x32xf32, #tpu.memory_space<vmem>>, vector<1x32xf32>
    %c0_46 = arith.constant 0 : index
    %c0_47 = arith.constant 0 : index
    %93 = vector.load %arg16[%c0_46, %c0_47] : memref<1x32xf32, #tpu.memory_space<vmem>>, vector<1x32xf32>
    %cst_48 = arith.constant dense<0.000000e+00> : vector<32xf32>
    %94 = vector.multi_reduction <add>, %91, %cst_48 [1] : vector<32x32xf32> to vector<32xf32>
    %95 = vector.shape_cast %94 : vector<32xf32> to vector<32x1xf32>
    %cst_49 = arith.constant 3.200000e+01 : f32
    %96 = vector.broadcast %cst_49 : f32 to vector<32x1xf32>
    %97 = arith.divf %95, %96 : vector<32x1xf32>
    %98 = vector.broadcast %97 : vector<32x1xf32> to vector<32x32xf32>
    %99 = arith.subf %91, %98 : vector<32x32xf32>
    %100 = vector.broadcast %97 : vector<32x1xf32> to vector<32x32xf32>
    %101 = arith.subf %91, %100 : vector<32x32xf32>
    %102 = arith.mulf %99, %101 : vector<32x32xf32>
    %cst_50 = arith.constant dense<0.000000e+00> : vector<32xf32>
    %103 = vector.multi_reduction <add>, %102, %cst_50 [1] : vector<32x32xf32> to vector<32xf32>
    %104 = vector.shape_cast %103 : vector<32xf32> to vector<32x1xf32>
    %cst_51 = arith.constant 3.200000e+01 : f32
    %105 = vector.broadcast %cst_51 : f32 to vector<32x1xf32>
    %106 = arith.divf %104, %105 : vector<32x1xf32>
    %107 = vector.broadcast %97 : vector<32x1xf32> to vector<32x32xf32>
    %108 = arith.subf %91, %107 : vector<32x32xf32>
    %cst_52 = arith.constant 9.99999974E-6 : f32
    %109 = vector.broadcast %cst_52 : f32 to vector<32x1xf32>
    %110 = arith.addf %106, %109 : vector<32x1xf32>
    %111 = math.rsqrt %110 : vector<32x1xf32>
    %112 = vector.broadcast %111 : vector<32x1xf32> to vector<32x32xf32>
    %113 = arith.mulf %108, %112 : vector<32x32xf32>
    %114 = vector.broadcast %92 : vector<1x32xf32> to vector<32x32xf32>
    %115 = arith.mulf %113, %114 : vector<32x32xf32>
    %116 = vector.broadcast %93 : vector<1x32xf32> to vector<32x32xf32>
    %117 = arith.addf %115, %116 : vector<32x32xf32>
    %118 = vector.shape_cast %117 : vector<32x32xf32> to vector<2x16x32xf32>
    %c0_53 = arith.constant 0 : index
    %c0_54 = arith.constant 0 : index
    %119 = vector.load %arg17[%c0_53, %c0_54] : memref<16x32xf32, #tpu.memory_space<vmem>>, vector<16x32xf32>
    %120 = vector.shape_cast %119 : vector<16x32xf32> to vector<1x16x32xf32>
    %121 = vector.broadcast %120 : vector<1x16x32xf32> to vector<2x16x32xf32>
    %122 = arith.mulf %118, %121 : vector<2x16x32xf32>
    %cst_55 = arith.constant dense<0.000000e+00> : vector<2x16xf32>
    %123 = vector.multi_reduction <add>, %122, %cst_55 [2] : vector<2x16x32xf32> to vector<2x16xf32>
    %cst_56 = arith.constant dense<0.000000e+00> : vector<2xf32>
    %124 = vector.multi_reduction <add>, %123, %cst_56 [1] : vector<2x16xf32> to vector<2xf32>
    %125 = vector.shape_cast %124 : vector<2xf32> to vector<2x1xf32>
    %c0_57 = arith.constant 0 : index
    %c0_58 = arith.constant 0 : index
    %126 = vector.load %arg18[%c0_57, %c0_58] : memref<1x1xf32, #tpu.memory_space<vmem>>, vector<1x1xf32>
    %127 = vector.broadcast %126 : vector<1x1xf32> to vector<2x1xf32>
    %128 = arith.addf %125, %127 : vector<2x1xf32>
    %129 = arith.negf %128 : vector<2x1xf32>
    %130 = math.exp %129 : vector<2x1xf32>
    %cst_59 = arith.constant 1.000000e+00 : f32
    %131 = vector.broadcast %cst_59 : f32 to vector<2x1xf32>
    %132 = arith.addf %131, %130 : vector<2x1xf32>
    %133 = arith.divf %131, %132 : vector<2x1xf32>
    %c0_60 = arith.constant 0 : index
    %c0_61 = arith.constant 0 : index
    %134 = vector.load %arg19[%c0_60, %c0_61] : memref<2x1xf32, #tpu.memory_space<vmem>>, vector<2x1xf32>
    tpu.vector_store %arg19[%c0_60, %c0_61], %133 {strides = array<i32>} : memref<2x1xf32, #tpu.memory_space<vmem>>, vector<2x1xf32>,
    return
  }
  func.func @transform_0(%arg0: i32) -> (i32, i32, i32, i32) {
    %c0_i32 = arith.constant 0 : i32
    %c0_i32_0 = arith.constant 0 : i32
    %c0_i32_1 = arith.constant 0 : i32
    %c0_i32_2 = arith.constant 0 : i32
    return %arg0, %c0_i32, %c0_i32_0, %c0_i32_1 : i32, i32, i32, i32
  }
  func.func @transform_1(%arg0: i32) -> (i32, i32) {
    %c0_i32 = arith.constant 0 : i32
    %c0_i32_0 = arith.constant 0 : i32
    %c0_i32_1 = arith.constant 0 : i32
    return %c0_i32, %c0_i32_0 : i32, i32
  }
  func.func @transform_2(%arg0: i32) -> (i32, i32) {
    %c0_i32 = arith.constant 0 : i32
    %c0_i32_0 = arith.constant 0 : i32
    %c0_i32_1 = arith.constant 0 : i32
    return %c0_i32, %c0_i32_0 : i32, i32
  }
  func.func @transform_3(%arg0: i32) -> (i32, i32) {
    %c0_i32 = arith.constant 0 : i32
    %c0_i32_0 = arith.constant 0 : i32
    %c0_i32_1 = arith.constant 0 : i32
    return %c0_i32, %c0_i32_0 : i32, i32
  }
  func.func @transform_4(%arg0: i32) -> (i32, i32) {
    %c0_i32 = arith.constant 0 : i32
    %c0_i32_0 = arith.constant 0 : i32
    %c0_i32_1 = arith.constant 0 : i32
    return %c0_i32, %c0_i32_0 : i32, i32
  }
  func.func @transform_5(%arg0: i32) -> (i32, i32) {
    %c0_i32 = arith.constant 0 : i32
    %c0_i32_0 = arith.constant 0 : i32
    %c0_i32_1 = arith.constant 0 : i32
    return %c0_i32, %c0_i32_0 : i32, i32
  }
  func.func @transform_6(%arg0: i32) -> (i32, i32) {
    %c0_i32 = arith.constant 0 : i32
    %c0_i32_0 = arith.constant 0 : i32
    %c0_i32_1 = arith.constant 0 : i32
    return %c0_i32, %c0_i32_0 : i32, i32
  }
  func.func @transform_7(%arg0: i32) -> (i32, i32) {
    %c0_i32 = arith.constant 0 : i32
    %c0_i32_0 = arith.constant 0 : i32
    %c0_i32_1 = arith.constant 0 : i32
    return %c0_i32, %c0_i32_0 : i32, i32
  }
  func.func @transform_8(%arg0: i32) -> (i32, i32) {
    %c0_i32 = arith.constant 0 : i32
    %c0_i32_0 = arith.constant 0 : i32
    %c0_i32_1 = arith.constant 0 : i32
    return %c0_i32, %c0_i32_0 : i32, i32
  }
  func.func @transform_9(%arg0: i32) -> (i32, i32) {
    %c0_i32 = arith.constant 0 : i32
    %c0_i32_0 = arith.constant 0 : i32
    %c0_i32_1 = arith.constant 0 : i32
    return %c0_i32, %c0_i32_0 : i32, i32
  }
  func.func @transform_10(%arg0: i32) -> (i32, i32) {
    %c0_i32 = arith.constant 0 : i32
    %c0_i32_0 = arith.constant 0 : i32
    %c0_i32_1 = arith.constant 0 : i32
    return %c0_i32, %c0_i32_0 : i32, i32
  }
  func.func @transform_11(%arg0: i32) -> (i32, i32) {
    %c0_i32 = arith.constant 0 : i32
    %c0_i32_0 = arith.constant 0 : i32
    %c0_i32_1 = arith.constant 0 : i32
    return %c0_i32, %c0_i32_0 : i32, i32
  }
  func.func @transform_12(%arg0: i32) -> (i32, i32) {
    %c0_i32 = arith.constant 0 : i32
    %c0_i32_0 = arith.constant 0 : i32
    %c0_i32_1 = arith.constant 0 : i32
    return %c0_i32, %c0_i32_0 : i32, i32
  }
  func.func @transform_13(%arg0: i32) -> (i32, i32) {
    %c0_i32 = arith.constant 0 : i32
    %c0_i32_0 = arith.constant 0 : i32
    %c0_i32_1 = arith.constant 0 : i32
    return %c0_i32, %c0_i32_0 : i32, i32
  }
  func.func @transform_14(%arg0: i32) -> (i32, i32) {
    %c0_i32 = arith.constant 0 : i32
    %c0_i32_0 = arith.constant 0 : i32
    %c0_i32_1 = arith.constant 0 : i32
    return %c0_i32, %c0_i32_0 : i32, i32
  }
  func.func @transform_15(%arg0: i32) -> (i32, i32) {
    %c0_i32 = arith.constant 0 : i32
    %c0_i32_0 = arith.constant 0 : i32
    %c0_i32_1 = arith.constant 0 : i32
    return %c0_i32, %c0_i32_0 : i32, i32
  }
  func.func @transform_16(%arg0: i32) -> (i32, i32) {
    %c0_i32 = arith.constant 0 : i32
    %c0_i32_0 = arith.constant 0 : i32
    %c0_i32_1 = arith.constant 0 : i32
    return %c0_i32, %c0_i32_0 : i32, i32
  }
  func.func @transform_17(%arg0: i32) -> (i32, i32) {
    %c0_i32 = arith.constant 0 : i32
    %c0_i32_0 = arith.constant 0 : i32
    %c0_i32_1 = arith.constant 0 : i32
    return %c0_i32, %c0_i32_0 : i32, i32
  }
  func.func @transform_18(%arg0: i32) -> (i32, i32) {
    %c0_i32 = arith.constant 0 : i32
    %c0_i32_0 = arith.constant 0 : i32
    return %arg0, %c0_i32 : i32, i32
  }
}

</mosaic_0001>

<llo_original>
// kernel: patchtst_forward.1
$region0: #{patchtst_forward.1}
  #allocation0 [shape = 'u32[]', space=smem, size = 0x4, offset = 0x4, fixed_abs, tag = 'smem constant byte address 0x4 - core index']
  #allocation1 [shape = 'u32[144,128]{1,0:T(1,128)}', space=vmem, size = 0x12000, scoped, tag = 'internal scratch']
  #allocation2 [shape = 'f32[1,1]{1,0:T(1,128)S(1)}', space=vmem, size = 0x200, scoped, tag = 'scoped memory for patchtst_forward.1']
  %s0 = inlined_call_operand.vmem [shape: f32[2,4,4,16], index: 0, kind: input, shape index: {}]
  %s1 = inlined_call_operand.vmem [shape: f32[4,32], index: 1, kind: input, shape index: {}]
  %s2 = inlined_call_operand.vmem [shape: f32[32,32], index: 2, kind: input, shape index: {}]
  %s3 = inlined_call_operand.vmem [shape: f32[16,32], index: 3, kind: input, shape index: {}]
  %s4 = inlined_call_operand.vmem [shape: f32[32,96], index: 4, kind: input, shape index: {}]
  %s5 = inlined_call_operand.vmem [shape: f32[1,96], index: 5, kind: input, shape index: {}]
  %s6 = inlined_call_operand.vmem [shape: f32[32,32], index: 6, kind: input, shape index: {}]
  %s7 = inlined_call_operand.vmem [shape: f32[1,32], index: 7, kind: input, shape index: {}]
  %s8 = inlined_call_operand.vmem [shape: f32[1,32], index: 8, kind: input, shape index: {}]
  %s9 = inlined_call_operand.vmem [shape: f32[1,32], index: 9, kind: input, shape index: {}]
  %s10 = inlined_call_operand.vmem [shape: f32[32,128], index: 10, kind: input, shape index: {}]
  %s11 = inlined_call_operand.vmem [shape: f32[1,128], index: 11, kind: input, shape index: {}]
  %s12 = inlined_call_operand.vmem [shape: f32[128,32], index: 12, kind: input, shape index: {}]
  %s13 = inlined_call_operand.vmem [shape: f32[1,32], index: 13, kind: input, shape index: {}]
  %s14 = inlined_call_operand.vmem [shape: f32[1,32], index: 14, kind: input, shape index: {}]
  %s15 = inlined_call_operand.vmem [shape: f32[1,32], index: 15, kind: input, shape index: {}]
  %s16 = inlined_call_operand.vmem [shape: f32[16,32], index: 16, kind: input, shape index: {}]
  %s17 = inlined_call_operand.<no memory space> [shape: f32[1,1], index: 17, kind: input, shape index: {}]
  %s18 = inlined_call_operand.vmem [shape: f32[2,1], index: 18, kind: output, shape index: {}]
  %s19 = sld [smem:[#allocation0]]
  $region82: #{patchtst_forward.1} parent=0
    _
  %s21 = ssub.s32 1, %s19
  %s22 = scalar_select 0, %s21, %s19
  %v23 = vstv %s17
  %24 = vst [vmem:[#allocation2] sm:$0x1] %v23
  // Predicated region
  $region2: #{patchtst_forward.1} parent=0 // pred_check
    _
  $region3: #{patchtst_forward.1} parent=0 // pred_check_branch
    %26 = sbr.rel (0) target = $region5
  $region4: #{patchtst_forward.1} parent=0 // pred_region
    _
  $region5: #{patchtst_forward.1} parent=0 // pred_fallthru
    _
  // Predicated region
  $region6: #{patchtst_forward.1} parent=0 // pred_check
    _
  $region7: #{patchtst_forward.1} parent=0 // pred_check_branch
    %28 = sbr.rel (0) target = $region9
  $region8: #{patchtst_forward.1} parent=0 // pred_region
    _
  $region9: #{patchtst_forward.1} parent=0 // pred_fallthru
    _
  // Predicated region
  $region10: #{patchtst_forward.1} parent=0 // pred_check
    _
  $region11: #{patchtst_forward.1} parent=0 // pred_check_branch
    %30 = sbr.rel (0) target = $region13
  $region12: #{patchtst_forward.1} parent=0 // pred_region
    _
  $region13: #{patchtst_forward.1} parent=0 // pred_fallthru
    _
  // Predicated region
  $region14: #{patchtst_forward.1} parent=0 // pred_check
    _
  $region15: #{patchtst_forward.1} parent=0 // pred_check_branch
    %32 = sbr.rel (0) target = $region17
  $region16: #{patchtst_forward.1} parent=0 // pred_region
    _
  $region17: #{patchtst_forward.1} parent=0 // pred_fallthru
    _
  // Predicated region
  $region18: #{patchtst_forward.1} parent=0 // pred_check
    _
  $region19: #{patchtst_forward.1} parent=0 // pred_check_branch
    %34 = sbr.rel (0) target = $region21
  $region20: #{patchtst_forward.1} parent=0 // pred_region
    _
  $region21: #{patchtst_forward.1} parent=0 // pred_fallthru
    _
  // Predicated region
  $region22: #{patchtst_forward.1} parent=0 // pred_check
    _
  $region23: #{patchtst_forward.1} parent=0 // pred_check_branch
    %36 = sbr.rel (0) target = $region25
  $region24: #{patchtst_forward.1} parent=0 // pred_region
    _
  $region25: #{patchtst_forward.1} parent=0 // pred_fallthru
    _
  // Predicated region
  $region26: #{patchtst_forward.1} parent=0 // pred_check
    _
  $region27: #{patchtst_forward.1} parent=0 // pred_check_branch
    %38 = sbr.rel (0) target = $region29
  $region28: #{patchtst_forward.1} parent=0 // pred_region
    _
  $region29: #{patchtst_forward.1} parent=0 // pred_fallthru
    _
  // Predicated region
  $region30: #{patchtst_forward.1} parent=0 // pred_check
    _
  $region31: #{patchtst_forward.1} parent=0 // pred_check_branch
    %40 = sbr.rel (0) target = $region33
  $region32: #{patchtst_forward.1} parent=0 // pred_region
    _
  $region33: #{patchtst_forward.1} parent=0 // pred_fallthru
    _
  // Predicated region
  $region34: #{patchtst_forward.1} parent=0 // pred_check
    _
  $region35: #{patchtst_forward.1} parent=0 // pred_check_branch
    %42 = sbr.rel (0) target = $region37
  $region36: #{patchtst_forward.1} parent=0 // pred_region
    _
  $region37: #{patchtst_forward.1} parent=0 // pred_fallthru
    _
  // Predicated region
  $region38: #{patchtst_forward.1} parent=0 // pred_check
    _
  $region39: #{patchtst_forward.1} parent=0 // pred_check_branch
    %44 = sbr.rel (0) target = $region41
  $region40: #{patchtst_forward.1} parent=0 // pred_region
    _
  $region41: #{patchtst_forward.1} parent=0 // pred_fallthru
    _
  // Predicated region
  $region42: #{patchtst_forward.1} parent=0 // pred_check
    _
  $region43: #{patchtst_forward.1} parent=0 // pred_check_branch
    %46 = sbr.rel (0) target = $region45
  $region44: #{patchtst_forward.1} parent=0 // pred_region
    _
  $region45: #{patchtst_forward.1} parent=0 // pred_fallthru
    _
  // Predicated region
  $region46: #{patchtst_forward.1} parent=0 // pred_check
    _
  $region47: #{patchtst_forward.1} parent=0 // pred_check_branch
    %48 = sbr.rel (0) target = $region49
  $region48: #{patchtst_forward.1} parent=0 // pred_region
    _
  $region49: #{patchtst_forward.1} parent=0 // pred_fallthru
    _
  // Predicated region
  $region50: #{patchtst_forward.1} parent=0 // pred_check
    _
  $region51: #{patchtst_forward.1} parent=0 // pred_check_branch
    %50 = sbr.rel (0) target = $region53
  $region52: #{patchtst_forward.1} parent=0 // pred_region
    _
  $region53: #{patchtst_forward.1} parent=0 // pred_fallthru
    _
  // Predicated region
  $region54: #{patchtst_forward.1} parent=0 // pred_check
    _
  $region55: #{patchtst_forward.1} parent=0 // pred_check_branch
    %52 = sbr.rel (0) target = $region57
  $region56: #{patchtst_forward.1} parent=0 // pred_region
    _
  $region57: #{patchtst_forward.1} parent=0 // pred_fallthru
    _
  // Predicated region
  $region58: #{patchtst_forward.1} parent=0 // pred_check
    _
  $region59: #{patchtst_forward.1} parent=0 // pred_check_branch
    %54 = sbr.rel (0) target = $region61
  $region60: #{patchtst_forward.1} parent=0 // pred_region
    _
  $region61: #{patchtst_forward.1} parent=0 // pred_fallthru
    _
  // Predicated region
  $region62: #{patchtst_forward.1} parent=0 // pred_check
    _
  $region63: #{patchtst_forward.1} parent=0 // pred_check_branch
    %56 = sbr.rel (0) target = $region65
  $region64: #{patchtst_forward.1} parent=0 // pred_region
    _
  $region65: #{patchtst_forward.1} parent=0 // pred_fallthru
    _
  // Predicated region
  $region66: #{patchtst_forward.1} parent=0 // pred_check
    _
  $region67: #{patchtst_forward.1} parent=0 // pred_check_branch
    %58 = sbr.rel (0) target = $region69
  $region68: #{patchtst_forward.1} parent=0 // pred_region
    _
  $region69: #{patchtst_forward.1} parent=0 // pred_fallthru
    _
  // Predicated region
  $region70: #{patchtst_forward.1} parent=0 // pred_check
    _
  $region71: #{patchtst_forward.1} parent=0 // pred_check_branch
    %60 = sbr.rel (0) target = $region73
  $region72: #{patchtst_forward.1} parent=0 // pred_region
    _
  $region73: #{patchtst_forward.1} parent=0 // pred_fallthru
    _
  %v61 = vld [vmem:[%s0] sm:$0xf]
  %v62 = vld [vmem:[%s0 + $0x4] sm:$0xf]
  %v63 = vld [vmem:[%s0 + $0x8] sm:$0xf]
  %v64 = vld [vmem:[%s0 + $0xc] sm:$0xf]
  %v65 = vld [vmem:[%s0 + $0x10] sm:$0xf]
  %v66 = vld [vmem:[%s0 + $0x14] sm:$0xf]
  %v67 = vld [vmem:[%s0 + $0x18] sm:$0xf]
  %v68 = vld [vmem:[%s0 + $0x1c] sm:$0xf]
  %v69 = vld [vmem:[%s3] sm:$0xff]
  %v70 = vld [vmem:[%s3 + $0x8] sm:$0xff]
  %v79 = vcombine.low %v61, %v62
  %v80 = vcombine.low %v63, %v64
  %v81 = vcombine.low %v65, %v66
  %v82 = vcombine.low %v67, %v68
  %vm83 = vcmask 130048
  %v84 = vsel %vm83, %v79, 0
  %v86 = vsel %vm83, %v80, 0
  %v88 = vsel %vm83, %v81, 0
  %v90 = vsel %vm83, %v82, 0
  %92 = vmatprep.subr.mxu0 0.0
  %93 = vmatpush1.msra.mxu0 %v69
  %94 = vmatprep.subr.mxu0 0.0
  %95 = vmatpush1.msra.mxu0 %v70
  %96 = vmatprep.subr.mxu0 0.0
  %97 = vmatpush1.msra.mxu0 0.0
  %98 = vmatprep.subr.mxu0 0.0
  %99 = vmatpush1.msra.mxu0 0.0
  %100 = vmatprep.subr.mxu0 0.0
  %101 = vmatpush1.msra.mxu0 0.0
  %102 = vmatprep.subr.mxu0 0.0
  %103 = vmatpush1.msra.mxu0 0.0
  %104 = vmatprep.subr.mxu0 0.0
  %105 = vmatpush1.msra.mxu0 0.0
  %106 = vmatprep.subr.mxu0 0.0
  %107 = vmatpush1.msra.mxu0 0.0
  %108 = vmatprep.subr.mxu0 0.0
  %109 = vmatpush1.msra.mxu0 0.0
  %110 = vmatprep.subr.mxu0 0.0
  %111 = vmatpush1.msra.mxu0 0.0
  %112 = vmatprep.subr.mxu0 0.0
  %113 = vmatpush1.msra.mxu0 0.0
  %114 = vmatprep.subr.mxu0 0.0
  %115 = vmatpush1.msra.mxu0 0.0
  %116 = vmatprep.subr.mxu0 0.0
  %117 = vmatpush1.msra.mxu0 0.0
  %118 = vmatprep.subr.mxu0 0.0
  %119 = vmatpush1.msra.mxu0 0.0
  %120 = vmatprep.subr.mxu0 0.0
  %121 = vmatpush1.msra.mxu0 0.0
  %122 = vmatprep.subr.mxu0 0.0
  %123 = vmatpush1.msra.mxu0 0.0
  %124 = vmatprep.subr.mxu0 0.0
  %125 = vmatpush1.msra.mxu0 0.0
  %126 = vmatprep.subr.mxu0 0.0
  %127 = vmatpush1.msra.mxu0 0.0
  %128 = vmatprep.subr.mxu0 0.0
  %129 = vmatpush1.msra.mxu0 0.0
  %130 = vmatprep.subr.mxu0 0.0
  %131 = vmatpush1.msra.mxu0 0.0
  %132 = vmatprep.subr.mxu0 0.0
  %133 = vmatpush1.msra.mxu0 0.0
  %134 = vmatprep.subr.mxu0 0.0
  %135 = vmatpush1.msra.mxu0 0.0
  %136 = vmatprep.subr.mxu0 0.0
  %137 = vmatpush1.msra.mxu0 0.0
  %138 = vmatprep.subr.mxu0 0.0
  %139 = vmatpush1.msra.mxu0 0.0
  %140 = vmatprep.subr.mxu0 0.0
  %141 = vmatpush1.msra.mxu0 0.0
  %142 = vmatprep.subr.mxu0 0.0
  %143 = vmatpush1.msra.mxu0 0.0
  %144 = vmatprep.subr.mxu0 0.0
  %145 = vmatpush1.msra.mxu0 0.0
  %146 = vmatprep.subr.mxu0 0.0
  %147 = vmatpush1.msra.mxu0 0.0
  %148 = vmatprep.subr.mxu0 0.0
  %149 = vmatpush1.msra.mxu0 0.0
  %150 = vmatprep.subr.mxu0 0.0
  %151 = vmatpush1.msra.mxu0 0.0
  %152 = vmatprep.subr.mxu0 0.0
  %153 = vmatpush1.msra.mxu0 0.0
  %154 = vmatprep.subr.mxu0 0.0
  %155 = vmatpush1.msra.mxu0 0.0
  %156 = vmatprep.mubr.f32.mxu0 0.0
  %157 = vmatmul.mubr.f32.gmra.mrb[0].mxu0 %v84
  %v158 = vpop.f32.mrb[0].mxu0
  %v159 = vadd.f32 0.0, %v158
  %v160 = vpop.f32.mrb[0].mxu0
  %161 = vmatprep.mubr.f32.mxu0 0.0
  %162 = vmatmul.mubr.f32.gmra.mrb[0].mxu0 %v86
  %v163 = vpop.f32.mrb[0].mxu0
  %v164 = vadd.f32 0.0, %v163
  %v165 = vpop.f32.mrb[0].mxu0
  %166 = vmatprep.mubr.f32.mxu0 0.0
  %167 = vmatmul.mubr.f32.gmra.mrb[0].mxu0 %v88
  %v168 = vpop.f32.mrb[0].mxu0
  %v169 = vadd.f32 0.0, %v168
  %v170 = vpop.f32.mrb[0].mxu0
  %171 = vmatprep.mubr.f32.mxu0 0.0
  %172 = vmatmul.mubr.f32.gmra.mrb[0].mxu0 %v90
  %v173 = vpop.f32.mrb[0].mxu0
  %v174 = vadd.f32 0.0, %v173
  %v175 = vpop.f32.mrb[0].mxu0
  %176 = vdwg.mxu0
  %v181 = vcombine.high %v159, %v159
  %v182 = vcombine.high %v164, %v164
  %v183 = vcombine.high %v169, %v169
  %v184 = vcombine.high %v174, %v174
  %v189 = vld [vmem:[%s1] sm:$0xf]
  %v190 = vadd.f32 %v159, %v189
  %v191 = vadd.f32 %v181, %v189
  %v192 = vadd.f32 %v164, %v189
  %v193 = vadd.f32 %v182, %v189
  %v194 = vadd.f32 %v169, %v189
  %v195 = vadd.f32 %v183, %v189
  %v196 = vadd.f32 %v174, %v189
  %v197 = vadd.f32 %v184, %v189
  %v198 = vld [vmem:[%s4] sm:$0xff]
  %v199 = vld [vmem:[%s4 + $0x8] sm:$0xff]
  %v200 = vld [vmem:[%s4 + $0x10] sm:$0xff]
  %v201 = vld [vmem:[%s4 + $0x18] sm:$0xff]
  %v202 = vld [vmem:[%s5] sm:$0x1]
  %v204 = vlaneseq
  %v205 = vshrl.u32 %v204, 7
  %v206 = vsub.s32 0, %v205
  %v207 = vrot.slane %v202, %v206
  %v217 = vcombine.low %v190, %v191
  %v218 = vcombine.low %v192, %v193
  %v219 = vcombine.low %v194, %v195
  %v220 = vcombine.low %v196, %v197
  %vm221 = vcmask 261120
  %v222 = vsel %vm221, %v217, 0
  %v224 = vsel %vm221, %v218, 0
  %v226 = vsel %vm221, %v219, 0
  %v228 = vsel %vm221, %v220, 0
  %230 = vmatprep.subr.mxu0 0.0
  %231 = vmatpush1.msra.mxu0 %v198
  %232 = vmatprep.subr.mxu0 0.0
  %233 = vmatpush1.msra.mxu0 %v199
  %234 = vmatprep.subr.mxu0 0.0
  %235 = vmatpush1.msra.mxu0 %v200
  %236 = vmatprep.subr.mxu0 0.0
  %237 = vmatpush1.msra.mxu0 %v201
  %238 = vmatprep.subr.mxu0 0.0
  %239 = vmatpush1.msra.mxu0 0.0
  %240 = vmatprep.subr.mxu0 0.0
  %241 = vmatpush1.msra.mxu0 0.0
  %242 = vmatprep.subr.mxu0 0.0
  %243 = vmatpush1.msra.mxu0 0.0
  %244 = vmatprep.subr.mxu0 0.0
  %245 = vmatpush1.msra.mxu0 0.0
  %246 = vmatprep.subr.mxu0 0.0
  %247 = vmatpush1.msra.mxu0 0.0
  %248 = vmatprep.subr.mxu0 0.0
  %249 = vmatpush1.msra.mxu0 0.0
  %250 = vmatprep.subr.mxu0 0.0
  %251 = vmatpush1.msra.mxu0 0.0
  %252 = vmatprep.subr.mxu0 0.0
  %253 = vmatpush1.msra.mxu0 0.0
  %254 = vmatprep.subr.mxu0 0.0
  %255 = vmatpush1.msra.mxu0 0.0
  %256 = vmatprep.subr.mxu0 0.0
  %257 = vmatpush1.msra.mxu0 0.0
  %258 = vmatprep.subr.mxu0 0.0
  %259 = vmatpush1.msra.mxu0 0.0
  %260 = vmatprep.subr.mxu0 0.0
  %261 = vmatpush1.msra.mxu0 0.0
  %262 = vmatprep.subr.mxu0 0.0
  %263 = vmatpush1.msra.mxu0 0.0
  %264 = vmatprep.subr.mxu0 0.0
  %265 = vmatpush1.msra.mxu0 0.0
  %266 = vmatprep.subr.mxu0 0.0
  %267 = vmatpush1.msra.mxu0 0.0
  %268 = vmatprep.subr.mxu0 0.0
  %269 = vmatpush1.msra.mxu0 0.0
  %270 = vmatprep.subr.mxu0 0.0
  %271 = vmatpush1.msra.mxu0 0.0
  %272 = vmatprep.subr.mxu0 0.0
  %273 = vmatpush1.msra.mxu0 0.0
  %274 = vmatprep.subr.mxu0 0.0
  %275 = vmatpush1.msra.mxu0 0.0
  %276 = vmatprep.subr.mxu0 0.0
  %277 = vmatpush1.msra.mxu0 0.0
  %278 = vmatprep.subr.mxu0 0.0
  %279 = vmatpush1.msra.mxu0 0.0
  %280 = vmatprep.subr.mxu0 0.0
  %281 = vmatpush1.msra.mxu0 0.0
  %282 = vmatprep.subr.mxu0 0.0
  %283 = vmatpush1.msra.mxu0 0.0
  %284 = vmatprep.subr.mxu0 0.0
  %285 = vmatpush1.msra.mxu0 0.0
  %286 = vmatprep.subr.mxu0 0.0
  %287 = vmatpush1.msra.mxu0 0.0
  %288 = vmatprep.subr.mxu0 0.0
  %289 = vmatpush1.msra.mxu0 0.0
  %290 = vmatprep.subr.mxu0 0.0
  %291 = vmatpush1.msra.mxu0 0.0
  %292 = vmatprep.subr.mxu0 0.0
  %293 = vmatpush1.msra.mxu0 0.0
  %294 = vmatprep.mubr.f32.mxu0 0.0
  %295 = vmatmul.mubr.f32.gmra.mrb[0].mxu0 %v222
  %v296 = vpop.f32.mrb[0].mxu0
  %v297 = vadd.f32 %v207, %v296
  %v298 = vpop.f32.mrb[0].mxu0
  %299 = vmatprep.mubr.f32.mxu0 0.0
  %300 = vmatmul.mubr.f32.gmra.mrb[0].mxu0 %v224
  %v301 = vpop.f32.mrb[0].mxu0
  %v302 = vadd.f32 %v207, %v301
  %v303 = vpop.f32.mrb[0].mxu0
  %304 = vmatprep.mubr.f32.mxu0 0.0
  %305 = vmatmul.mubr.f32.gmra.mrb[0].mxu0 %v226
  %v306 = vpop.f32.mrb[0].mxu0
  %v307 = vadd.f32 %v207, %v306
  %v308 = vpop.f32.mrb[0].mxu0
  %309 = vmatprep.mubr.f32.mxu0 0.0
  %310 = vmatmul.mubr.f32.gmra.mrb[0].mxu0 %v228
  %v311 = vpop.f32.mrb[0].mxu0
  %v312 = vadd.f32 %v207, %v311
  %v313 = vpop.f32.mrb[0].mxu0
  %314 = vdwg.mxu0
  %v319 = vcombine.high %v297, %v297
  %v321 = vunpack.c.l.s4 1966171168
  %v322 = vunpack.c.0.s8 %v321
  %v323 = vlaneseq
  %v324 = vshrl.u32 %v323, 7
  %v325 = vsub.s32 %v322, %v324
  %v326 = vrot.slane %v297, %v325
  %v328 = vunpack.c.l.s4 1966171168
  %v329 = vunpack.c.0.s8 %v328
  %v330 = vlaneseq
  %v331 = vshrl.u32 %v330, 7
  %v332 = vsub.s32 %v329, %v331
  %v333 = vrot.slane %v319, %v332
  %v334 = vcombine.high %v326, %v326
  %v335 = vcombine.high %v333, %v333
  %v337 = vunpack.c.l.s4 1966171168
  %v338 = vunpack.c.0.s8 %v337
  %v339 = vlaneseq
  %v340 = vshrl.u32 %v339, 7
  %v341 = vsub.s32 %v338, %v340
  %v342 = vrot.slane %v326, %v341
  %v344 = vunpack.c.l.s4 1966171168
  %v345 = vunpack.c.0.s8 %v344
  %v346 = vlaneseq
  %v347 = vshrl.u32 %v346, 7
  %v348 = vsub.s32 %v345, %v347
  %v349 = vrot.slane %v333, %v348
  %v351 = vunpack.c.l.s4 1966171168
  %v352 = vunpack.c.0.s8 %v351
  %v353 = vlaneseq
  %v354 = vshrl.u32 %v353, 7
  %v355 = vsub.s32 %v352, %v354
  %v356 = vrot.slane %v334, %v355
  %v358 = vunpack.c.l.s4 1966171168
  %v359 = vunpack.c.0.s8 %v358
  %v360 = vlaneseq
  %v361 = vshrl.u32 %v360, 7
  %v362 = vsub.s32 %v359, %v361
  %v363 = vrot.slane %v335, %v362
  %v364 = vcombine.high %v342, %v342
  %v365 = vcombine.high %v349, %v349
  %v366 = vcombine.high %v356, %v356
  %v367 = vcombine.high %v363, %v363
  %v368 = vcombine.high %v302, %v302
  %v370 = vunpack.c.l.s4 1966171168
  %v371 = vunpack.c.0.s8 %v370
  %v372 = vlaneseq
  %v373 = vshrl.u32 %v372, 7
  %v374 = vsub.s32 %v371, %v373
  %v375 = vrot.slane %v302, %v374
  %v377 = vunpack.c.l.s4 1966171168
  %v378 = vunpack.c.0.s8 %v377
  %v379 = vlaneseq
  %v380 = vshrl.u32 %v379, 7
  %v381 = vsub.s32 %v378, %v380
  %v382 = vrot.slane %v368, %v381
  %v383 = vcombine.high %v375, %v375
  %v384 = vcombine.high %v382, %v382
  %v386 = vunpack.c.l.s4 1966171168
  %v387 = vunpack.c.0.s8 %v386
  %v388 = vlaneseq
  %v389 = vshrl.u32 %v388, 7
  %v390 = vsub.s32 %v387, %v389
  %v391 = vrot.slane %v375, %v390
  %v393 = vunpack.c.l.s4 1966171168
  %v394 = vunpack.c.0.s8 %v393
  %v395 = vlaneseq
  %v396 = vshrl.u32 %v395, 7
  %v397 = vsub.s32 %v394, %v396
  %v398 = vrot.slane %v382, %v397
  %v400 = vunpack.c.l.s4 1966171168
  %v401 = vunpack.c.0.s8 %v400
  %v402 = vlaneseq
  %v403 = vshrl.u32 %v402, 7
  %v404 = vsub.s32 %v401, %v403
  %v405 = vrot.slane %v383, %v404
  %v407 = vunpack.c.l.s4 1966171168
  %v408 = vunpack.c.0.s8 %v407
  %v409 = vlaneseq
  %v410 = vshrl.u32 %v409, 7
  %v411 = vsub.s32 %v408, %v410
  %v412 = vrot.slane %v384, %v411
  %v413 = vcombine.high %v391, %v391
  %v414 = vcombine.high %v398, %v398
  %v415 = vcombine.high %v405, %v405
  %v416 = vcombine.high %v412, %v412
  %v417 = vcombine.high %v307, %v307
  %v419 = vunpack.c.l.s4 1966171168
  %v420 = vunpack.c.0.s8 %v419
  %v421 = vlaneseq
  %v422 = vshrl.u32 %v421, 7
  %v423 = vsub.s32 %v420, %v422
  %v424 = vrot.slane %v307, %v423
  %v426 = vunpack.c.l.s4 1966171168
  %v427 = vunpack.c.0.s8 %v426
  %v428 = vlaneseq
  %v429 = vshrl.u32 %v428, 7
  %v430 = vsub.s32 %v427, %v429
  %v431 = vrot.slane %v417, %v430
  %v432 = vcombine.high %v424, %v424
  %v433 = vcombine.high %v431, %v431
  %v435 = vunpack.c.l.s4 1966171168
  %v436 = vunpack.c.0.s8 %v435
  %v437 = vlaneseq
  %v438 = vshrl.u32 %v437, 7
  %v439 = vsub.s32 %v436, %v438
  %v440 = vrot.slane %v424, %v439
  %v442 = vunpack.c.l.s4 1966171168
  %v443 = vunpack.c.0.s8 %v442
  %v444 = vlaneseq
  %v445 = vshrl.u32 %v444, 7
  %v446 = vsub.s32 %v443, %v445
  %v447 = vrot.slane %v431, %v446
  %v449 = vunpack.c.l.s4 1966171168
  %v450 = vunpack.c.0.s8 %v449
  %v451 = vlaneseq
  %v452 = vshrl.u32 %v451, 7
  %v453 = vsub.s32 %v450, %v452
  %v454 = vrot.slane %v432, %v453
  %v456 = vunpack.c.l.s4 1966171168
  %v457 = vunpack.c.0.s8 %v456
  %v458 = vlaneseq
  %v459 = vshrl.u32 %v458, 7
  %v460 = vsub.s32 %v457, %v459
  %v461 = vrot.slane %v433, %v460
  %v462 = vcombine.high %v440, %v440
  %v463 = vcombine.high %v447, %v447
  %v464 = vcombine.high %v454, %v454
  %v465 = vcombine.high %v461, %v461
  %v466 = vcombine.high %v312, %v312
  %v468 = vunpack.c.l.s4 1966171168
  %v469 = vunpack.c.0.s8 %v468
  %v470 = vlaneseq
  %v471 = vshrl.u32 %v470, 7
  %v472 = vsub.s32 %v469, %v471
  %v473 = vrot.slane %v312, %v472
  %v475 = vunpack.c.l.s4 1966171168
  %v476 = vunpack.c.0.s8 %v475
  %v477 = vlaneseq
  %v478 = vshrl.u32 %v477, 7
  %v479 = vsub.s32 %v476, %v478
  %v480 = vrot.slane %v466, %v479
  %v481 = vcombine.high %v473, %v473
  %v482 = vcombine.high %v480, %v480
  %v484 = vunpack.c.l.s4 1966171168
  %v485 = vunpack.c.0.s8 %v484
  %v486 = vlaneseq
  %v487 = vshrl.u32 %v486, 7
  %v488 = vsub.s32 %v485, %v487
  %v489 = vrot.slane %v473, %v488
  %v491 = vunpack.c.l.s4 1966171168
  %v492 = vunpack.c.0.s8 %v491
  %v493 = vlaneseq
  %v494 = vshrl.u32 %v493, 7
  %v495 = vsub.s32 %v492, %v494
  %v496 = vrot.slane %v480, %v495
  %v498 = vunpack.c.l.s4 1966171168
  %v499 = vunpack.c.0.s8 %v498
  %v500 = vlaneseq
  %v501 = vshrl.u32 %v500, 7
  %v502 = vsub.s32 %v499, %v501
  %v503 = vrot.slane %v481, %v502
  %v505 = vunpack.c.l.s4 1966171168
  %v506 = vunpack.c.0.s8 %v505
  %v507 = vlaneseq
  %v508 = vshrl.u32 %v507, 7
  %v509 = vsub.s32 %v506, %v508
  %v510 = vrot.slane %v482, %v509
  %v511 = vcombine.high %v489, %v489
  %v512 = vcombine.high %v496, %v496
  %v513 = vcombine.high %v503, %v503
  %v514 = vcombine.high %v510, %v510
  %v515 = vlaneseq
  %v516 = vshrl.u32 %v515, 7
  %v517 = vsub.s32 0, %v516
  %v518 = vrot.slane %v342, %v517
  %v519 = vlaneseq
  %v520 = vshrl.u32 %v519, 7
  %v521 = vsub.s32 0, %v520
  %v522 = vrot.slane %v356, %v521
  %v523 = vlaneseq
  %v524 = vshrl.u32 %v523, 7
  %v525 = vsub.s32 0, %v524
  %v526 = vrot.slane %v364, %v525
  %v527 = vlaneseq
  %v528 = vshrl.u32 %v527, 7
  %v529 = vsub.s32 0, %v528
  %v530 = vrot.slane %v366, %v529
  %v531 = vlaneseq
  %v532 = vshrl.u32 %v531, 7
  %v533 = vsub.s32 0, %v532
  %v534 = vrot.slane %v349, %v533
  %v535 = vlaneseq
  %v536 = vshrl.u32 %v535, 7
  %v537 = vsub.s32 0, %v536
  %v538 = vrot.slane %v363, %v537
  %v539 = vlaneseq
  %v540 = vshrl.u32 %v539, 7
  %v541 = vsub.s32 0, %v540
  %v542 = vrot.slane %v365, %v541
  %v543 = vlaneseq
  %v544 = vshrl.u32 %v543, 7
  %v545 = vsub.s32 0, %v544
  %v546 = vrot.slane %v367, %v545
  %v547 = vlaneseq
  %v548 = vshrl.u32 %v547, 7
  %v549 = vsub.s32 0, %v548
  %v550 = vrot.slane %v391, %v549
  %v551 = vlaneseq
  %v552 = vshrl.u32 %v551, 7
  %v553 = vsub.s32 0, %v552
  %v554 = vrot.slane %v405, %v553
  %v555 = vlaneseq
  %v556 = vshrl.u32 %v555, 7
  %v557 = vsub.s32 0, %v556
  %v558 = vrot.slane %v413, %v557
  %v559 = vlaneseq
  %v560 = vshrl.u32 %v559, 7
  %v561 = vsub.s32 0, %v560
  %v562 = vrot.slane %v415, %v561
  %v563 = vlaneseq
  %v564 = vshrl.u32 %v563, 7
  %v565 = vsub.s32 0, %v564
  %v566 = vrot.slane %v398, %v565
  %v567 = vlaneseq
  %v568 = vshrl.u32 %v567, 7
  %v569 = vsub.s32 0, %v568
  %v570 = vrot.slane %v412, %v569
  %v571 = vlaneseq
  %v572 = vshrl.u32 %v571, 7
  %v573 = vsub.s32 0, %v572
  %v574 = vrot.slane %v414, %v573
  %v575 = vlaneseq
  %v576 = vshrl.u32 %v575, 7
  %v577 = vsub.s32 0, %v576
  %v578 = vrot.slane %v416, %v577
  %v579 = vlaneseq
  %v580 = vshrl.u32 %v579, 7
  %v581 = vsub.s32 0, %v580
  %v582 = vrot.slane %v440, %v581
  %v583 = vlaneseq
  %v584 = vshrl.u32 %v583, 7
  %v585 = vsub.s32 0, %v584
  %v586 = vrot.slane %v454, %v585
  %v587 = vlaneseq
  %v588 = vshrl.u32 %v587, 7
  %v589 = vsub.s32 0, %v588
  %v590 = vrot.slane %v462, %v589
  %v591 = vlaneseq
  %v592 = vshrl.u32 %v591, 7
  %v593 = vsub.s32 0, %v592
  %v594 = vrot.slane %v464, %v593
  %v595 = vlaneseq
  %v596 = vshrl.u32 %v595, 7
  %v597 = vsub.s32 0, %v596
  %v598 = vrot.slane %v447, %v597
  %v599 = vlaneseq
  %v600 = vshrl.u32 %v599, 7
  %v601 = vsub.s32 0, %v600
  %v602 = vrot.slane %v461, %v601
  %v603 = vlaneseq
  %v604 = vshrl.u32 %v603, 7
  %v605 = vsub.s32 0, %v604
  %v606 = vrot.slane %v463, %v605
  %v607 = vlaneseq
  %v608 = vshrl.u32 %v607, 7
  %v609 = vsub.s32 0, %v608
  %v610 = vrot.slane %v465, %v609
  %v611 = vlaneseq
  %v612 = vshrl.u32 %v611, 7
  %v613 = vsub.s32 0, %v612
  %v614 = vrot.slane %v489, %v613
  %v615 = vlaneseq
  %v616 = vshrl.u32 %v615, 7
  %v617 = vsub.s32 0, %v616
  %v618 = vrot.slane %v503, %v617
  %v619 = vlaneseq
  %v620 = vshrl.u32 %v619, 7
  %v621 = vsub.s32 0, %v620
  %v622 = vrot.slane %v511, %v621
  %v623 = vlaneseq
  %v624 = vshrl.u32 %v623, 7
  %v625 = vsub.s32 0, %v624
  %v626 = vrot.slane %v513, %v625
  %v627 = vlaneseq
  %v628 = vshrl.u32 %v627, 7
  %v629 = vsub.s32 0, %v628
  %v630 = vrot.slane %v496, %v629
  %v631 = vlaneseq
  %v632 = vshrl.u32 %v631, 7
  %v633 = vsub.s32 0, %v632
  %v634 = vrot.slane %v510, %v633
  %v635 = vlaneseq
  %v636 = vshrl.u32 %v635, 7
  %v637 = vsub.s32 0, %v636
  %v638 = vrot.slane %v512, %v637
  %v639 = vlaneseq
  %v640 = vshrl.u32 %v639, 7
  %v641 = vsub.s32 0, %v640
  %v642 = vrot.slane %v514, %v641
  %675 = vrot.lane.b32.xlu0 %v297, 96
  %v676 = vpop.permute.xlu0 %675
  %677 = vrot.lane.b32.xlu0 %v319, 96
  %v678 = vpop.permute.xlu0 %677
  %679 = vrot.lane.b32.xlu0 %v302, 96
  %v680 = vpop.permute.xlu0 %679
  %681 = vrot.lane.b32.xlu0 %v368, 96
  %v682 = vpop.permute.xlu0 %681
  %683 = vrot.lane.b32.xlu0 %v307, 96
  %v684 = vpop.permute.xlu0 %683
  %685 = vrot.lane.b32.xlu0 %v417, 96
  %v686 = vpop.permute.xlu0 %685
  %687 = vrot.lane.b32.xlu0 %v312, 96
  %v688 = vpop.permute.xlu0 %687
  %689 = vrot.lane.b32.xlu0 %v466, 96
  %v690 = vpop.permute.xlu0 %689
  %v699 = vmul.f32 %v518, %v676
  %v700 = vmul.f32 %v522, %v676
  %v701 = vmul.f32 %v526, %v676
  %v702 = vmul.f32 %v530, %v676
  %v703 = vmul.f32 %v534, %v678
  %v704 = vmul.f32 %v538, %v678
  %v705 = vmul.f32 %v542, %v678
  %v706 = vmul.f32 %v546, %v678
  %v707 = vmul.f32 %v550, %v680
  %v708 = vmul.f32 %v554, %v680
  %v709 = vmul.f32 %v558, %v680
  %v710 = vmul.f32 %v562, %v680
  %v711 = vmul.f32 %v566, %v682
  %v712 = vmul.f32 %v570, %v682
  %v713 = vmul.f32 %v574, %v682
  %v714 = vmul.f32 %v578, %v682
  %v715 = vmul.f32 %v582, %v684
  %v716 = vmul.f32 %v586, %v684
  %v717 = vmul.f32 %v590, %v684
  %v718 = vmul.f32 %v594, %v684
  %v719 = vmul.f32 %v598, %v686
  %v720 = vmul.f32 %v602, %v686
  %v721 = vmul.f32 %v606, %v686
  %v722 = vmul.f32 %v610, %v686
  %v723 = vmul.f32 %v614, %v688
  %v724 = vmul.f32 %v618, %v688
  %v725 = vmul.f32 %v622, %v688
  %v726 = vmul.f32 %v626, %v688
  %v727 = vmul.f32 %v630, %v690
  %v728 = vmul.f32 %v634, %v690
  %v729 = vmul.f32 %v638, %v690
  %v730 = vmul.f32 %v642, %v690
  %v731 = vld [vmem:[%s2] sm:$0xff]
  %v732 = vld [vmem:[%s2 + $0x8] sm:$0xff]
  %v733 = vld [vmem:[%s2 + $0x10] sm:$0xff]
  %v734 = vld [vmem:[%s2 + $0x18] sm:$0xff]
  %v767 = vcombine.low %v699, %v700
  %v768 = vcombine.low %v701, %v702
  %v769 = vcombine.low %v703, %v704
  %v770 = vcombine.low %v705, %v706
  %v771 = vcombine.low %v707, %v708
  %v772 = vcombine.low %v709, %v710
  %v773 = vcombine.low %v711, %v712
  %v774 = vcombine.low %v713, %v714
  %v775 = vcombine.low %v715, %v716
  %v776 = vcombine.low %v717, %v718
  %v777 = vcombine.low %v719, %v720
  %v778 = vcombine.low %v721, %v722
  %v779 = vcombine.low %v723, %v724
  %v780 = vcombine.low %v725, %v726
  %v781 = vcombine.low %v727, %v728
  %v782 = vcombine.low %v729, %v730
  %v783 = vsel %vm221, %v767, 0
  %v785 = vsel %vm221, %v768, 0
  %v787 = vsel %vm221, %v769, 0
  %v789 = vsel %vm221, %v770, 0
  %v791 = vsel %vm221, %v771, 0
  %v793 = vsel %vm221, %v772, 0
  %v795 = vsel %vm221, %v773, 0
  %v797 = vsel %vm221, %v774, 0
  %v799 = vsel %vm221, %v775, 0
  %v801 = vsel %vm221, %v776, 0
  %v803 = vsel %vm221, %v777, 0
  %v805 = vsel %vm221, %v778, 0
  %v807 = vsel %vm221, %v779, 0
  %v809 = vsel %vm221, %v780, 0
  %v811 = vsel %vm221, %v781, 0
  %v813 = vsel %vm221, %v782, 0
  %815 = vmatprep.subr.mxu0 0.0
  %816 = vmatpush1.msra.mxu0 %v731
  %817 = vmatprep.subr.mxu0 0.0
  %818 = vmatpush1.msra.mxu0 %v732
  %819 = vmatprep.subr.mxu0 0.0
  %820 = vmatpush1.msra.mxu0 %v733
  %821 = vmatprep.subr.mxu0 0.0
  %822 = vmatpush1.msra.mxu0 %v734
  %823 = vmatprep.subr.mxu0 0.0
  %824 = vmatpush1.msra.mxu0 0.0
  %825 = vmatprep.subr.mxu0 0.0
  %826 = vmatpush1.msra.mxu0 0.0
  %827 = vmatprep.subr.mxu0 0.0
  %828 = vmatpush1.msra.mxu0 0.0
  %829 = vmatprep.subr.mxu0 0.0
  %830 = vmatpush1.msra.mxu0 0.0
  %831 = vmatprep.subr.mxu0 0.0
  %832 = vmatpush1.msra.mxu0 0.0
  %833 = vmatprep.subr.mxu0 0.0
  %834 = vmatpush1.msra.mxu0 0.0
  %835 = vmatprep.subr.mxu0 0.0
  %836 = vmatpush1.msra.mxu0 0.0
  %837 = vmatprep.subr.mxu0 0.0
  %838 = vmatpush1.msra.mxu0 0.0
  %839 = vmatprep.subr.mxu0 0.0
  %840 = vmatpush1.msra.mxu0 0.0
  %841 = vmatprep.subr.mxu0 0.0
  %842 = vmatpush1.msra.mxu0 0.0
  %843 = vmatprep.subr.mxu0 0.0
  %844 = vmatpush1.msra.mxu0 0.0
  %845 = vmatprep.subr.mxu0 0.0
  %846 = vmatpush1.msra.mxu0 0.0
  %847 = vmatprep.subr.mxu0 0.0
  %848 = vmatpush1.msra.mxu0 0.0
  %849 = vmatprep.subr.mxu0 0.0
  %850 = vmatpush1.msra.mxu0 0.0
  %851 = vmatprep.subr.mxu0 0.0
  %852 = vmatpush1.msra.mxu0 0.0
  %853 = vmatprep.subr.mxu0 0.0
  %854 = vmatpush1.msra.mxu0 0.0
  %855 = vmatprep.subr.mxu0 0.0
  %856 = vmatpush1.msra.mxu0 0.0
  %857 = vmatprep.subr.mxu0 0.0
  %858 = vmatpush1.msra.mxu0 0.0
  %859 = vmatprep.subr.mxu0 0.0
  %860 = vmatpush1.msra.mxu0 0.0
  %861 = vmatprep.subr.mxu0 0.0
  %862 = vmatpush1.msra.mxu0 0.0
  %863 = vmatprep.subr.mxu0 0.0
  %864 = vmatpush1.msra.mxu0 0.0
  %865 = vmatprep.subr.mxu0 0.0
  %866 = vmatpush1.msra.mxu0 0.0
  %867 = vmatprep.subr.mxu0 0.0
  %868 = vmatpush1.msra.mxu0 0.0
  %869 = vmatprep.subr.mxu0 0.0
  %870 = vmatpush1.msra.mxu0 0.0
  %871 = vmatprep.subr.mxu0 0.0
  %872 = vmatpush1.msra.mxu0 0.0
  %873 = vmatprep.subr.mxu0 0.0
  %874 = vmatpush1.msra.mxu0 0.0
  %875 = vmatprep.subr.mxu0 0.0
  %876 = vmatpush1.msra.mxu0 0.0
  %877 = vmatprep.subr.mxu0 0.0
  %878 = vmatpush1.msra.mxu0 0.0
  %879 = vmatprep.mubr.f32.mxu0 0.0
  %880 = vmatmul.mubr.f32.gmra.mrb[0].mxu0 %v783
  %v881 = vpop.f32.mrb[0].mxu0
  %v882 = vadd.f32 0.0, %v881
  %v883 = vpop.f32.mrb[0].mxu0
  %884 = vmatprep.mubr.f32.mxu0 0.0
  %885 = vmatmul.mubr.f32.gmra.mrb[0].mxu0 %v785
  %v886 = vpop.f32.mrb[0].mxu0
  %v887 = vadd.f32 0.0, %v886
  %v888 = vpop.f32.mrb[0].mxu0
  %889 = vmatprep.mubr.f32.mxu0 0.0
  %890 = vmatmul.mubr.f32.gmra.mrb[0].mxu0 %v787
  %v891 = vpop.f32.mrb[0].mxu0
  %v892 = vadd.f32 0.0, %v891
  %v893 = vpop.f32.mrb[0].mxu0
  %894 = vmatprep.mubr.f32.mxu0 0.0
  %895 = vmatmul.mubr.f32.gmra.mrb[0].mxu0 %v789
  %v896 = vpop.f32.mrb[0].mxu0
  %v897 = vadd.f32 0.0, %v896
  %v898 = vpop.f32.mrb[0].mxu0
  %899 = vmatprep.mubr.f32.mxu0 0.0
  %900 = vmatmul.mubr.f32.gmra.mrb[0].mxu0 %v791
  %v901 = vpop.f32.mrb[0].mxu0
  %v902 = vadd.f32 0.0, %v901
  %v903 = vpop.f32.mrb[0].mxu0
  %904 = vmatprep.mubr.f32.mxu0 0.0
  %905 = vmatmul.mubr.f32.gmra.mrb[0].mxu0 %v793
  %v906 = vpop.f32.mrb[0].mxu0
  %v907 = vadd.f32 0.0, %v906
  %v908 = vpop.f32.mrb[0].mxu0
  %909 = vmatprep.mubr.f32.mxu0 0.0
  %910 = vmatmul.mubr.f32.gmra.mrb[0].mxu0 %v795
  %v911 = vpop.f32.mrb[0].mxu0
  %v912 = vadd.f32 0.0, %v911
  %v913 = vpop.f32.mrb[0].mxu0
  %914 = vmatprep.mubr.f32.mxu0 0.0
  %915 = vmatmul.mubr.f32.gmra.mrb[0].mxu0 %v797
  %v916 = vpop.f32.mrb[0].mxu0
  %v917 = vadd.f32 0.0, %v916
  %v918 = vpop.f32.mrb[0].mxu0
  %919 = vmatprep.mubr.f32.mxu0 0.0
  %920 = vmatmul.mubr.f32.gmra.mrb[0].mxu0 %v799
  %v921 = vpop.f32.mrb[0].mxu0
  %v922 = vadd.f32 0.0, %v921
  %v923 = vpop.f32.mrb[0].mxu0
  %924 = vmatprep.mubr.f32.mxu0 0.0
  %925 = vmatmul.mubr.f32.gmra.mrb[0].mxu0 %v801
  %v926 = vpop.f32.mrb[0].mxu0
  %v927 = vadd.f32 0.0, %v926
  %v928 = vpop.f32.mrb[0].mxu0
  %929 = vmatprep.mubr.f32.mxu0 0.0
  %930 = vmatmul.mubr.f32.gmra.mrb[0].mxu0 %v803
  %v931 = vpop.f32.mrb[0].mxu0
  %v932 = vadd.f32 0.0, %v931
  %v933 = vpop.f32.mrb[0].mxu0
  %934 = vmatprep.mubr.f32.mxu0 0.0
  %935 = vmatmul.mubr.f32.gmra.mrb[0].mxu0 %v805
  %v936 = vpop.f32.mrb[0].mxu0
  %v937 = vadd.f32 0.0, %v936
  %v938 = vpop.f32.mrb[0].mxu0
  %939 = vmatprep.mubr.f32.mxu0 0.0
  %940 = vmatmul.mubr.f32.gmra.mrb[0].mxu0 %v807
  %v941 = vpop.f32.mrb[0].mxu0
  %v942 = vadd.f32 0.0, %v941
  %v943 = vpop.f32.mrb[0].mxu0
  %944 = vmatprep.mubr.f32.mxu0 0.0
  %945 = vmatmul.mubr.f32.gmra.mrb[0].mxu0 %v809
  %v946 = vpop.f32.mrb[0].mxu0
  %v947 = vadd.f32 0.0, %v946
  %v948 = vpop.f32.mrb[0].mxu0
  %949 = vmatprep.mubr.f32.mxu0 0.0
  %950 = vmatmul.mubr.f32.gmra.mrb[0].mxu0 %v811
  %v951 = vpop.f32.mrb[0].mxu0
  %v952 = vadd.f32 0.0, %v951
  %v953 = vpop.f32.mrb[0].mxu0
  %954 = vmatprep.mubr.f32.mxu0 0.0
  %955 = vmatmul.mubr.f32.gmra.mrb[0].mxu0 %v813
  %v956 = vpop.f32.mrb[0].mxu0
  %v957 = vadd.f32 0.0, %v956
  %v958 = vpop.f32.mrb[0].mxu0
  %959 = vdwg.mxu0
  %v976 = vcombine.high %v882, %v882
  %v977 = vcombine.high %v887, %v887
  %v978 = vcombine.high %v892, %v892
  %v979 = vcombine.high %v897, %v897
  %v980 = vcombine.high %v902, %v902
  %v981 = vcombine.high %v907, %v907
  %v982 = vcombine.high %v912, %v912
  %v983 = vcombine.high %v917, %v917
  %v984 = vcombine.high %v922, %v922
  %v985 = vcombine.high %v927, %v927
  %v986 = vcombine.high %v932, %v932
  %v987 = vcombine.high %v937, %v937
  %v988 = vcombine.high %v942, %v942
  %v989 = vcombine.high %v947, %v947
  %v990 = vcombine.high %v952, %v952
  %v991 = vcombine.high %v957, %v957
  %v1008 = vmul.f32 %v882, 0.35355338
  %v1009 = vmul.f32 %v976, 0.35355338
  %v1010 = vmul.f32 %v887, 0.35355338
  %v1011 = vmul.f32 %v977, 0.35355338
  %v1012 = vmul.f32 %v892, 0.35355338
  %v1013 = vmul.f32 %v978, 0.35355338
  %v1014 = vmul.f32 %v897, 0.35355338
  %v1015 = vmul.f32 %v979, 0.35355338
  %v1016 = vmul.f32 %v902, 0.35355338
  %v1017 = vmul.f32 %v980, 0.35355338
  %v1018 = vmul.f32 %v907, 0.35355338
  %v1019 = vmul.f32 %v981, 0.35355338
  %v1020 = vmul.f32 %v912, 0.35355338
  %v1021 = vmul.f32 %v982, 0.35355338
  %v1022 = vmul.f32 %v917, 0.35355338
  %v1023 = vmul.f32 %v983, 0.35355338
  %v1024 = vmul.f32 %v922, 0.35355338
  %v1025 = vmul.f32 %v984, 0.35355338
  %v1026 = vmul.f32 %v927, 0.35355338
  %v1027 = vmul.f32 %v985, 0.35355338
  %v1028 = vmul.f32 %v932, 0.35355338
  %v1029 = vmul.f32 %v986, 0.35355338
  %v1030 = vmul.f32 %v937, 0.35355338
  %v1031 = vmul.f32 %v987, 0.35355338
  %v1032 = vmul.f32 %v942, 0.35355338
  %v1033 = vmul.f32 %v988, 0.35355338
  %v1034 = vmul.f32 %v947, 0.35355338
  %v1035 = vmul.f32 %v989, 0.35355338
  %v1036 = vmul.f32 %v952, 0.35355338
  %v1037 = vmul.f32 %v990, 0.35355338
  %v1038 = vmul.f32 %v957, 0.35355338
  %v1039 = vmul.f32 %v991, 0.35355338
  %vm1040 = vcmask 257024
  %v1041 = vsel %vm1040, %v1008, -inf
  %v1042 = vrot.slane %v1041, 4
  %v1043 = vmax.f32 %v1041, %v1042
  %v1044 = vrot.slane %v1043, 2
  %v1045 = vmax.f32 %v1043, %v1044
  %v1046 = vrot.slane %v1045, 1
  %v1047 = vmax.f32 %v1045, %v1046
  %v1048 = vsel %vm1040, %v1009, -inf
  %v1049 = vrot.slane %v1048, 4
  %v1050 = vmax.f32 %v1048, %v1049
  %v1051 = vrot.slane %v1050, 2
  %v1052 = vmax.f32 %v1050, %v1051
  %v1053 = vrot.slane %v1052, 1
  %v1054 = vmax.f32 %v1052, %v1053
  %v1055 = vsel %vm1040, %v1010, -inf
  %v1056 = vrot.slane %v1055, 4
  %v1057 = vmax.f32 %v1055, %v1056
  %v1058 = vrot.slane %v1057, 2
  %v1059 = vmax.f32 %v1057, %v1058
  %v1060 = vrot.slane %v1059, 1
  %v1061 = vmax.f32 %v1059, %v1060
  %v1062 = vsel %vm1040, %v1011, -inf
  %v1063 = vrot.slane %v1062, 4
  %v1064 = vmax.f32 %v1062, %v1063
  %v1065 = vrot.slane %v1064, 2
  %v1066 = vmax.f32 %v1064, %v1065
  %v1067 = vrot.slane %v1066, 1
  %v1068 = vmax.f32 %v1066, %v1067
  %v1069 = vsel %vm1040, %v1012, -inf
  %v1070 = vrot.slane %v1069, 4
  %v1071 = vmax.f32 %v1069, %v1070
  %v1072 = vrot.slane %v1071, 2
  %v1073 = vmax.f32 %v1071, %v1072
  %v1074 = vrot.slane %v1073, 1
  %v1075 = vmax.f32 %v1073, %v1074
  %v1076 = vsel %vm1040, %v1013, -inf
  %v1077 = vrot.slane %v1076, 4
  %v1078 = vmax.f32 %v1076, %v1077
  %v1079 = vrot.slane %v1078, 2
  %v1080 = vmax.f32 %v1078, %v1079
  %v1081 = vrot.slane %v1080, 1
  %v1082 = vmax.f32 %v1080, %v1081
  %v1083 = vsel %vm1040, %v1014, -inf
  %v1084 = vrot.slane %v1083, 4
  %v1085 = vmax.f32 %v1083, %v1084
  %v1086 = vrot.slane %v1085, 2
  %v1087 = vmax.f32 %v1085, %v1086
  %v1088 = vrot.slane %v1087, 1
  %v1089 = vmax.f32 %v1087, %v1088
  %v1090 = vsel %vm1040, %v1015, -inf
  %v1091 = vrot.slane %v1090, 4
  %v1092 = vmax.f32 %v1090, %v1091
  %v1093 = vrot.slane %v1092, 2
  %v1094 = vmax.f32 %v1092, %v1093
  %v1095 = vrot.slane %v1094, 1
  %v1096 = vmax.f32 %v1094, %v1095
  %v1097 = vsel %vm1040, %v1016, -inf
  %v1098 = vrot.slane %v1097, 4
  %v1099 = vmax.f32 %v1097, %v1098
  %v1100 = vrot.slane %v1099, 2
  %v1101 = vmax.f32 %v1099, %v1100
  %v1102 = vrot.slane %v1101, 1
  %v1103 = vmax.f32 %v1101, %v1102
  %v1104 = vsel %vm1040, %v1017, -inf
  %v1105 = vrot.slane %v1104, 4
  %v1106 = vmax.f32 %v1104, %v1105
  %v1107 = vrot.slane %v1106, 2
  %v1108 = vmax.f32 %v1106, %v1107
  %v1109 = vrot.slane %v1108, 1
  %v1110 = vmax.f32 %v1108, %v1109
  %v1111 = vsel %vm1040, %v1018, -inf
  %v1112 = vrot.slane %v1111, 4
  %v1113 = vmax.f32 %v1111, %v1112
  %v1114 = vrot.slane %v1113, 2
  %v1115 = vmax.f32 %v1113, %v1114
  %v1116 = vrot.slane %v1115, 1
  %v1117 = vmax.f32 %v1115, %v1116
  %v1118 = vsel %vm1040, %v1019, -inf
  %v1119 = vrot.slane %v1118, 4
  %v1120 = vmax.f32 %v1118, %v1119
  %v1121 = vrot.slane %v1120, 2
  %v1122 = vmax.f32 %v1120, %v1121
  %v1123 = vrot.slane %v1122, 1
  %v1124 = vmax.f32 %v1122, %v1123
  %v1125 = vsel %vm1040, %v1020, -inf
  %v1126 = vrot.slane %v1125, 4
  %v1127 = vmax.f32 %v1125, %v1126
  %v1128 = vrot.slane %v1127, 2
  %v1129 = vmax.f32 %v1127, %v1128
  %v1130 = vrot.slane %v1129, 1
  %v1131 = vmax.f32 %v1129, %v1130
  %v1132 = vsel %vm1040, %v1021, -inf
  %v1133 = vrot.slane %v1132, 4
  %v1134 = vmax.f32 %v1132, %v1133
  %v1135 = vrot.slane %v1134, 2
  %v1136 = vmax.f32 %v1134, %v1135
  %v1137 = vrot.slane %v1136, 1
  %v1138 = vmax.f32 %v1136, %v1137
  %v1139 = vsel %vm1040, %v1022, -inf
  %v1140 = vrot.slane %v1139, 4
  %v1141 = vmax.f32 %v1139, %v1140
  %v1142 = vrot.slane %v1141, 2
  %v1143 = vmax.f32 %v1141, %v1142
  %v1144 = vrot.slane %v1143, 1
  %v1145 = vmax.f32 %v1143, %v1144
  %v1146 = vsel %vm1040, %v1023, -inf
  %v1147 = vrot.slane %v1146, 4
  %v1148 = vmax.f32 %v1146, %v1147
  %v1149 = vrot.slane %v1148, 2
  %v1150 = vmax.f32 %v1148, %v1149
  %v1151 = vrot.slane %v1150, 1
  %v1152 = vmax.f32 %v1150, %v1151
  %v1153 = vsel %vm1040, %v1024, -inf
  %v1154 = vrot.slane %v1153, 4
  %v1155 = vmax.f32 %v1153, %v1154
  %v1156 = vrot.slane %v1155, 2
  %v1157 = vmax.f32 %v1155, %v1156
  %v1158 = vrot.slane %v1157, 1
  %v1159 = vmax.f32 %v1157, %v1158
  %v1160 = vsel %vm1040, %v1025, -inf
  %v1161 = vrot.slane %v1160, 4
  %v1162 = vmax.f32 %v1160, %v1161
  %v1163 = vrot.slane %v1162, 2
  %v1164 = vmax.f32 %v1162, %v1163
  %v1165 = vrot.slane %v1164, 1
  %v1166 = vmax.f32 %v1164, %v1165
  %v1167 = vsel %vm1040, %v1026, -inf
  %v1168 = vrot.slane %v1167, 4
  %v1169 = vmax.f32 %v1167, %v1168
  %v1170 = vrot.slane %v1169, 2
  %v1171 = vmax.f32 %v1169, %v1170
  %v1172 = vrot.slane %v1171, 1
  %v1173 = vmax.f32 %v1171, %v1172
  %v1174 = vsel %vm1040, %v1027, -inf
  %v1175 = vrot.slane %v1174, 4
  %v1176 = vmax.f32 %v1174, %v1175
  %v1177 = vrot.slane %v1176, 2
  %v1178 = vmax.f32 %v1176, %v1177
  %v1179 = vrot.slane %v1178, 1
  %v1180 = vmax.f32 %v1178, %v1179
  %v1181 = vsel %vm1040, %v1028, -inf
  %v1182 = vrot.slane %v1181, 4
  %v1183 = vmax.f32 %v1181, %v1182
  %v1184 = vrot.slane %v1183, 2
  %v1185 = vmax.f32 %v1183, %v1184
  %v1186 = vrot.slane %v1185, 1
  %v1187 = vmax.f32 %v1185, %v1186
  %v1188 = vsel %vm1040, %v1029, -inf
  %v1189 = vrot.slane %v1188, 4
  %v1190 = vmax.f32 %v1188, %v1189
  %v1191 = vrot.slane %v1190, 2
  %v1192 = vmax.f32 %v1190, %v1191
  %v1193 = vrot.slane %v1192, 1
  %v1194 = vmax.f32 %v1192, %v1193
  %v1195 = vsel %vm1040, %v1030, -inf
  %v1196 = vrot.slane %v1195, 4
  %v1197 = vmax.f32 %v1195, %v1196
  %v1198 = vrot.slane %v1197, 2
  %v1199 = vmax.f32 %v1197, %v1198
  %v1200 = vrot.slane %v1199, 1
  %v1201 = vmax.f32 %v1199, %v1200
  %v1202 = vsel %vm1040, %v1031, -inf
  %v1203 = vrot.slane %v1202, 4
  %v1204 = vmax.f32 %v1202, %v1203
  %v1205 = vrot.slane %v1204, 2
  %v1206 = vmax.f32 %v1204, %v1205
  %v1207 = vrot.slane %v1206, 1
  %v1208 = vmax.f32 %v1206, %v1207
  %v1209 = vsel %vm1040, %v1032, -inf
  %v1210 = vrot.slane %v1209, 4
  %v1211 = vmax.f32 %v1209, %v1210
  %v1212 = vrot.slane %v1211, 2
  %v1213 = vmax.f32 %v1211, %v1212
  %v1214 = vrot.slane %v1213, 1
  %v1215 = vmax.f32 %v1213, %v1214
  %v1216 = vsel %vm1040, %v1033, -inf
  %v1217 = vrot.slane %v1216, 4
  %v1218 = vmax.f32 %v1216, %v1217
  %v1219 = vrot.slane %v1218, 2
  %v1220 = vmax.f32 %v1218, %v1219
  %v1221 = vrot.slane %v1220, 1
  %v1222 = vmax.f32 %v1220, %v1221
  %v1223 = vsel %vm1040, %v1034, -inf
  %v1224 = vrot.slane %v1223, 4
  %v1225 = vmax.f32 %v1223, %v1224
  %v1226 = vrot.slane %v1225, 2
  %v1227 = vmax.f32 %v1225, %v1226
  %v1228 = vrot.slane %v1227, 1
  %v1229 = vmax.f32 %v1227, %v1228
  %v1230 = vsel %vm1040, %v1035, -inf
  %v1231 = vrot.slane %v1230, 4
  %v1232 = vmax.f32 %v1230, %v1231
  %v1233 = vrot.slane %v1232, 2
  %v1234 = vmax.f32 %v1232, %v1233
  %v1235 = vrot.slane %v1234, 1
  %v1236 = vmax.f32 %v1234, %v1235
  %v1237 = vsel %vm1040, %v1036, -inf
  %v1238 = vrot.slane %v1237, 4
  %v1239 = vmax.f32 %v1237, %v1238
  %v1240 = vrot.slane %v1239, 2
  %v1241 = vmax.f32 %v1239, %v1240
  %v1242 = vrot.slane %v1241, 1
  %v1243 = vmax.f32 %v1241, %v1242
  %v1244 = vsel %vm1040, %v1037, -inf
  %v1245 = vrot.slane %v1244, 4
  %v1246 = vmax.f32 %v1244, %v1245
  %v1247 = vrot.slane %v1246, 2
  %v1248 = vmax.f32 %v1246, %v1247
  %v1249 = vrot.slane %v1248, 1
  %v1250 = vmax.f32 %v1248, %v1249
  %v1251 = vsel %vm1040, %v1038, -inf
  %v1252 = vrot.slane %v1251, 4
  %v1253 = vmax.f32 %v1251, %v1252
  %v1254 = vrot.slane %v1253, 2
  %v1255 = vmax.f32 %v1253, %v1254
  %v1256 = vrot.slane %v1255, 1
  %v1257 = vmax.f32 %v1255, %v1256
  %v1258 = vsel %vm1040, %v1039, -inf
  %v1259 = vrot.slane %v1258, 4
  %v1260 = vmax.f32 %v1258, %v1259
  %v1261 = vrot.slane %v1260, 2
  %v1262 = vmax.f32 %v1260, %v1261
  %v1263 = vrot.slane %v1262, 1
  %v1264 = vmax.f32 %v1262, %v1263
  %v1265 = vsub.f32 %v1008, %v1047
  %v1266 = vsub.f32 %v1009, %v1054
  %v1267 = vsub.f32 %v1010, %v1061
  %v1268 = vsub.f32 %v1011, %v1068
  %v1269 = vsub.f32 %v1012, %v1075
  %v1270 = vsub.f32 %v1013, %v1082
  %v1271 = vsub.f32 %v1014, %v1089
  %v1272 = vsub.f32 %v1015, %v1096
  %v1273 = vsub.f32 %v1016, %v1103
  %v1274 = vsub.f32 %v1017, %v1110
  %v1275 = vsub.f32 %v1018, %v1117
  %v1276 = vsub.f32 %v1019, %v1124
  %v1277 = vsub.f32 %v1020, %v1131
  %v1278 = vsub.f32 %v1021, %v1138
  %v1279 = vsub.f32 %v1022, %v1145
  %v1280 = vsub.f32 %v1023, %v1152
  %v1281 = vsub.f32 %v1024, %v1159
  %v1282 = vsub.f32 %v1025, %v1166
  %v1283 = vsub.f32 %v1026, %v1173
  %v1284 = vsub.f32 %v1027, %v1180
  %v1285 = vsub.f32 %v1028, %v1187
  %v1286 = vsub.f32 %v1029, %v1194
  %v1287 = vsub.f32 %v1030, %v1201
  %v1288 = vsub.f32 %v1031, %v1208
  %v1289 = vsub.f32 %v1032, %v1215
  %v1290 = vsub.f32 %v1033, %v1222
  %v1291 = vsub.f32 %v1034, %v1229
  %v1292 = vsub.f32 %v1035, %v1236
  %v1293 = vsub.f32 %v1036, %v1243
  %v1294 = vsub.f32 %v1037, %v1250
  %v1295 = vsub.f32 %v1038, %v1257
  %v1296 = vsub.f32 %v1039, %v1264
  %v1297 = vmul.f32 %v1265, 1.442695
  %v1298 = vpow.pop %v1297
  %v1299 = vmul.f32 %v1266, 1.442695
  %v1300 = vpow.pop %v1299
  %v1301 = vmul.f32 %v1267, 1.442695
  %v1302 = vpow.pop %v1301
  %v1303 = vmul.f32 %v1268, 1.442695
  %v1304 = vpow.pop %v1303
  %v1305 = vmul.f32 %v1269, 1.442695
  %v1306 = vpow.pop %v1305
  %v1307 = vmul.f32 %v1270, 1.442695
  %v1308 = vpow.pop %v1307
  %v1309 = vmul.f32 %v1271, 1.442695
  %v1310 = vpow.pop %v1309
  %v1311 = vmul.f32 %v1272, 1.442695
  %v1312 = vpow.pop %v1311
  %v1313 = vmul.f32 %v1273, 1.442695
  %v1314 = vpow.pop %v1313
  %v1315 = vmul.f32 %v1274, 1.442695
  %v1316 = vpow.pop %v1315
  %v1317 = vmul.f32 %v1275, 1.442695
  %v1318 = vpow.pop %v1317
  %v1319 = vmul.f32 %v1276, 1.442695
  %v1320 = vpow.pop %v1319
  %v1321 = vmul.f32 %v1277, 1.442695
  %v1322 = vpow.pop %v1321
  %v1323 = vmul.f32 %v1278, 1.442695
  %v1324 = vpow.pop %v1323
  %v1325 = vmul.f32 %v1279, 1.442695
  %v1326 = vpow.pop %v1325
  %v1327 = vmul.f32 %v1280, 1.442695
  %v1328 = vpow.pop %v1327
  %v1329 = vmul.f32 %v1281, 1.442695
  %v1330 = vpow.pop %v1329
  %v1331 = vmul.f32 %v1282, 1.442695
  %v1332 = vpow.pop %v1331
  %v1333 = vmul.f32 %v1283, 1.442695
  %v1334 = vpow.pop %v1333
  %v1335 = vmul.f32 %v1284, 1.442695
  %v1336 = vpow.pop %v1335
  %v1337 = vmul.f32 %v1285, 1.442695
  %v1338 = vpow.pop %v1337
  %v1339 = vmul.f32 %v1286, 1.442695
  %v1340 = vpow.pop %v1339
  %v1341 = vmul.f32 %v1287, 1.442695
  %v1342 = vpow.pop %v1341
  %v1343 = vmul.f32 %v1288, 1.442695
  %v1344 = vpow.pop %v1343
  %v1345 = vmul.f32 %v1289, 1.442695
  %v1346 = vpow.pop %v1345
  %v1347 = vmul.f32 %v1290, 1.442695
  %v1348 = vpow.pop %v1347
  %v1349 = vmul.f32 %v1291, 1.442695
  %v1350 = vpow.pop %v1349
  %v1351 = vmul.f32 %v1292, 1.442695
  %v1352 = vpow.pop %v1351
  %v1353 = vmul.f32 %v1293, 1.442695
  %v1354 = vpow.pop %v1353
  %v1355 = vmul.f32 %v1294, 1.442695
  %v1356 = vpow.pop %v1355
  %v1357 = vmul.f32 %v1295, 1.442695
  %v1358 = vpow.pop %v1357
  %v1359 = vmul.f32 %v1296, 1.442695
  %v1360 = vpow.pop %v1359
  %v1361 = vsel %vm1040, %v1298, 0.0
  %v1362 = vrot.slane %v1361, 4
  %v1363 = vadd.f32 %v1361, %v1362
  %v1364 = vrot.slane %v1363, 2
  %v1365 = vadd.f32 %v1363, %v1364
  %v1366 = vrot.slane %v1365, 1
  %v1367 = vadd.f32 %v1365, %v1366
  %v1368 = vsel %vm1040, %v1300, 0.0
  %v1369 = vrot.slane %v1368, 4
  %v1370 = vadd.f32 %v1368, %v1369
  %v1371 = vrot.slane %v1370, 2
  %v1372 = vadd.f32 %v1370, %v1371
  %v1373 = vrot.slane %v1372, 1
  %v1374 = vadd.f32 %v1372, %v1373
  %v1375 = vsel %vm1040, %v1302, 0.0
  %v1376 = vrot.slane %v1375, 4
  %v1377 = vadd.f32 %v1375, %v1376
  %v1378 = vrot.slane %v1377, 2
  %v1379 = vadd.f32 %v1377, %v1378
  %v1380 = vrot.slane %v1379, 1
  %v1381 = vadd.f32 %v1379, %v1380
  %v1382 = vsel %vm1040, %v1304, 0.0
  %v1383 = vrot.slane %v1382, 4
  %v1384 = vadd.f32 %v1382, %v1383
  %v1385 = vrot.slane %v1384, 2
  %v1386 = vadd.f32 %v1384, %v1385
  %v1387 = vrot.slane %v1386, 1
  %v1388 = vadd.f32 %v1386, %v1387
  %v1389 = vsel %vm1040, %v1306, 0.0
  %v1390 = vrot.slane %v1389, 4
  %v1391 = vadd.f32 %v1389, %v1390
  %v1392 = vrot.slane %v1391, 2
  %v1393 = vadd.f32 %v1391, %v1392
  %v1394 = vrot.slane %v1393, 1
  %v1395 = vadd.f32 %v1393, %v1394
  %v1396 = vsel %vm1040, %v1308, 0.0
  %v1397 = vrot.slane %v1396, 4
  %v1398 = vadd.f32 %v1396, %v1397
  %v1399 = vrot.slane %v1398, 2
  %v1400 = vadd.f32 %v1398, %v1399
  %v1401 = vrot.slane %v1400, 1
  %v1402 = vadd.f32 %v1400, %v1401
  %v1403 = vsel %vm1040, %v1310, 0.0
  %v1404 = vrot.slane %v1403, 4
  %v1405 = vadd.f32 %v1403, %v1404
  %v1406 = vrot.slane %v1405, 2
  %v1407 = vadd.f32 %v1405, %v1406
  %v1408 = vrot.slane %v1407, 1
  %v1409 = vadd.f32 %v1407, %v1408
  %v1410 = vsel %vm1040, %v1312, 0.0
  %v1411 = vrot.slane %v1410, 4
  %v1412 = vadd.f32 %v1410, %v1411
  %v1413 = vrot.slane %v1412, 2
  %v1414 = vadd.f32 %v1412, %v1413
  %v1415 = vrot.slane %v1414, 1
  %v1416 = vadd.f32 %v1414, %v1415
  %v1417 = vsel %vm1040, %v1314, 0.0
  %v1418 = vrot.slane %v1417, 4
  %v1419 = vadd.f32 %v1417, %v1418
  %v1420 = vrot.slane %v1419, 2
  %v1421 = vadd.f32 %v1419, %v1420
  %v1422 = vrot.slane %v1421, 1
  %v1423 = vadd.f32 %v1421, %v1422
  %v1424 = vsel %vm1040, %v1316, 0.0
  %v1425 = vrot.slane %v1424, 4
  %v1426 = vadd.f32 %v1424, %v1425
  %v1427 = vrot.slane %v1426, 2
  %v1428 = vadd.f32 %v1426, %v1427
  %v1429 = vrot.slane %v1428, 1
  %v1430 = vadd.f32 %v1428, %v1429
  %v1431 = vsel %vm1040, %v1318, 0.0
  %v1432 = vrot.slane %v1431, 4
  %v1433 = vadd.f32 %v1431, %v1432
  %v1434 = vrot.slane %v1433, 2
  %v1435 = vadd.f32 %v1433, %v1434
  %v1436 = vrot.slane %v1435, 1
  %v1437 = vadd.f32 %v1435, %v1436
  %v1438 = vsel %vm1040, %v1320, 0.0
  %v1439 = vrot.slane %v1438, 4
  %v1440 = vadd.f32 %v1438, %v1439
  %v1441 = vrot.slane %v1440, 2
  %v1442 = vadd.f32 %v1440, %v1441
  %v1443 = vrot.slane %v1442, 1
  %v1444 = vadd.f32 %v1442, %v1443
  %v1445 = vsel %vm1040, %v1322, 0.0
  %v1446 = vrot.slane %v1445, 4
  %v1447 = vadd.f32 %v1445, %v1446
  %v1448 = vrot.slane %v1447, 2
  %v1449 = vadd.f32 %v1447, %v1448
  %v1450 = vrot.slane %v1449, 1
  %v1451 = vadd.f32 %v1449, %v1450
  %v1452 = vsel %vm1040, %v1324, 0.0
  %v1453 = vrot.slane %v1452, 4
  %v1454 = vadd.f32 %v1452, %v1453
  %v1455 = vrot.slane %v1454, 2
  %v1456 = vadd.f32 %v1454, %v1455
  %v1457 = vrot.slane %v1456, 1
  %v1458 = vadd.f32 %v1456, %v1457
  %v1459 = vsel %vm1040, %v1326, 0.0
  %v1460 = vrot.slane %v1459, 4
  %v1461 = vadd.f32 %v1459, %v1460
  %v1462 = vrot.slane %v1461, 2
  %v1463 = vadd.f32 %v1461, %v1462
  %v1464 = vrot.slane %v1463, 1
  %v1465 = vadd.f32 %v1463, %v1464
  %v1466 = vsel %vm1040, %v1328, 0.0
  %v1467 = vrot.slane %v1466, 4
  %v1468 = vadd.f32 %v1466, %v1467
  %v1469 = vrot.slane %v1468, 2
  %v1470 = vadd.f32 %v1468, %v1469
  %v1471 = vrot.slane %v1470, 1
  %v1472 = vadd.f32 %v1470, %v1471
  %v1473 = vsel %vm1040, %v1330, 0.0
  %v1474 = vrot.slane %v1473, 4
  %v1475 = vadd.f32 %v1473, %v1474
  %v1476 = vrot.slane %v1475, 2
  %v1477 = vadd.f32 %v1475, %v1476
  %v1478 = vrot.slane %v1477, 1
  %v1479 = vadd.f32 %v1477, %v1478
  %v1480 = vsel %vm1040, %v1332, 0.0
  %v1481 = vrot.slane %v1480, 4
  %v1482 = vadd.f32 %v1480, %v1481
  %v1483 = vrot.slane %v1482, 2
  %v1484 = vadd.f32 %v1482, %v1483
  %v1485 = vrot.slane %v1484, 1
  %v1486 = vadd.f32 %v1484, %v1485
  %v1487 = vsel %vm1040, %v1334, 0.0
  %v1488 = vrot.slane %v1487, 4
  %v1489 = vadd.f32 %v1487, %v1488
  %v1490 = vrot.slane %v1489, 2
  %v1491 = vadd.f32 %v1489, %v1490
  %v1492 = vrot.slane %v1491, 1
  %v1493 = vadd.f32 %v1491, %v1492
  %v1494 = vsel %vm1040, %v1336, 0.0
  %v1495 = vrot.slane %v1494, 4
  %v1496 = vadd.f32 %v1494, %v1495
  %v1497 = vrot.slane %v1496, 2
  %v1498 = vadd.f32 %v1496, %v1497
  %v1499 = vrot.slane %v1498, 1
  %v1500 = vadd.f32 %v1498, %v1499
  %v1501 = vsel %vm1040, %v1338, 0.0
  %v1502 = vrot.slane %v1501, 4
  %v1503 = vadd.f32 %v1501, %v1502
  %v1504 = vrot.slane %v1503, 2
  %v1505 = vadd.f32 %v1503, %v1504
  %v1506 = vrot.slane %v1505, 1
  %v1507 = vadd.f32 %v1505, %v1506
  %v1508 = vsel %vm1040, %v1340, 0.0
  %v1509 = vrot.slane %v1508, 4
  %v1510 = vadd.f32 %v1508, %v1509
  %v1511 = vrot.slane %v1510, 2
  %v1512 = vadd.f32 %v1510, %v1511
  %v1513 = vrot.slane %v1512, 1
  %v1514 = vadd.f32 %v1512, %v1513
  %v1515 = vsel %vm1040, %v1342, 0.0
  %v1516 = vrot.slane %v1515, 4
  %v1517 = vadd.f32 %v1515, %v1516
  %v1518 = vrot.slane %v1517, 2
  %v1519 = vadd.f32 %v1517, %v1518
  %v1520 = vrot.slane %v1519, 1
  %v1521 = vadd.f32 %v1519, %v1520
  %v1522 = vsel %vm1040, %v1344, 0.0
  %v1523 = vrot.slane %v1522, 4
  %v1524 = vadd.f32 %v1522, %v1523
  %v1525 = vrot.slane %v1524, 2
  %v1526 = vadd.f32 %v1524, %v1525
  %v1527 = vrot.slane %v1526, 1
  %v1528 = vadd.f32 %v1526, %v1527
  %v1529 = vsel %vm1040, %v1346, 0.0
  %v1530 = vrot.slane %v1529, 4
  %v1531 = vadd.f32 %v1529, %v1530
  %v1532 = vrot.slane %v1531, 2
  %v1533 = vadd.f32 %v1531, %v1532
  %v1534 = vrot.slane %v1533, 1
  %v1535 = vadd.f32 %v1533, %v1534
  %v1536 = vsel %vm1040, %v1348, 0.0
  %v1537 = vrot.slane %v1536, 4
  %v1538 = vadd.f32 %v1536, %v1537
  %v1539 = vrot.slane %v1538, 2
  %v1540 = vadd.f32 %v1538, %v1539
  %v1541 = vrot.slane %v1540, 1
  %v1542 = vadd.f32 %v1540, %v1541
  %v1543 = vsel %vm1040, %v1350, 0.0
  %v1544 = vrot.slane %v1543, 4
  %v1545 = vadd.f32 %v1543, %v1544
  %v1546 = vrot.slane %v1545, 2
  %v1547 = vadd.f32 %v1545, %v1546
  %v1548 = vrot.slane %v1547, 1
  %v1549 = vadd.f32 %v1547, %v1548
  %v1550 = vsel %vm1040, %v1352, 0.0
  %v1551 = vrot.slane %v1550, 4
  %v1552 = vadd.f32 %v1550, %v1551
  %v1553 = vrot.slane %v1552, 2
  %v1554 = vadd.f32 %v1552, %v1553
  %v1555 = vrot.slane %v1554, 1
  %v1556 = vadd.f32 %v1554, %v1555
  %v1557 = vsel %vm1040, %v1354, 0.0
  %v1558 = vrot.slane %v1557, 4
  %v1559 = vadd.f32 %v1557, %v1558
  %v1560 = vrot.slane %v1559, 2
  %v1561 = vadd.f32 %v1559, %v1560
  %v1562 = vrot.slane %v1561, 1
  %v1563 = vadd.f32 %v1561, %v1562
  %v1564 = vsel %vm1040, %v1356, 0.0
  %v1565 = vrot.slane %v1564, 4
  %v1566 = vadd.f32 %v1564, %v1565
  %v1567 = vrot.slane %v1566, 2
  %v1568 = vadd.f32 %v1566, %v1567
  %v1569 = vrot.slane %v1568, 1
  %v1570 = vadd.f32 %v1568, %v1569
  %v1571 = vsel %vm1040, %v1358, 0.0
  %v1572 = vrot.slane %v1571, 4
  %v1573 = vadd.f32 %v1571, %v1572
  %v1574 = vrot.slane %v1573, 2
  %v1575 = vadd.f32 %v1573, %v1574
  %v1576 = vrot.slane %v1575, 1
  %v1577 = vadd.f32 %v1575, %v1576
  %v1578 = vsel %vm1040, %v1360, 0.0
  %v1579 = vrot.slane %v1578, 4
  %v1580 = vadd.f32 %v1578, %v1579
  %v1581 = vrot.slane %v1580, 2
  %v1582 = vadd.f32 %v1580, %v1581
  %v1583 = vrot.slane %v1582, 1
  %v1584 = vadd.f32 %v1582, %v1583
  %v1585 = vrcp.pop %v1367
  %v1586 = vrcp.pop %v1374
  %v1587 = vrcp.pop %v1381
  %v1588 = vrcp.pop %v1388
  %v1589 = vrcp.pop %v1395
  %v1590 = vrcp.pop %v1402
  %v1591 = vrcp.pop %v1409
  %v1592 = vrcp.pop %v1416
  %v1593 = vrcp.pop %v1423
  %v1594 = vrcp.pop %v1430
  %v1595 = vrcp.pop %v1437
  %v1596 = vrcp.pop %v1444
  %v1597 = vrcp.pop %v1451
  %v1598 = vrcp.pop %v1458
  %v1599 = vrcp.pop %v1465
  %v1600 = vrcp.pop %v1472
  %v1601 = vrcp.pop %v1479
  %v1602 = vrcp.pop %v1486
  %v1603 = vrcp.pop %v1493
  %v1604 = vrcp.pop %v1500
  %v1605 = vrcp.pop %v1507
  %v1606 = vrcp.pop %v1514
  %v1607 = vrcp.pop %v1521
  %v1608 = vrcp.pop %v1528
  %v1609 = vrcp.pop %v1535
  %v1610 = vrcp.pop %v1542
  %v1611 = vrcp.pop %v1549
  %v1612 = vrcp.pop %v1556
  %v1613 = vrcp.pop %v1563
  %v1614 = vrcp.pop %v1570
  %v1615 = vrcp.pop %v1577
  %v1616 = vrcp.pop %v1584
  %v1617 = vmul.f32 %v1298, %v1585
  %v1618 = vmul.f32 %v1300, %v1586
  %v1619 = vmul.f32 %v1302, %v1587
  %v1620 = vmul.f32 %v1304, %v1588
  %v1621 = vmul.f32 %v1306, %v1589
  %v1622 = vmul.f32 %v1308, %v1590
  %v1623 = vmul.f32 %v1310, %v1591
  %v1624 = vmul.f32 %v1312, %v1592
  %v1625 = vmul.f32 %v1314, %v1593
  %v1626 = vmul.f32 %v1316, %v1594
  %v1627 = vmul.f32 %v1318, %v1595
  %v1628 = vmul.f32 %v1320, %v1596
  %v1629 = vmul.f32 %v1322, %v1597
  %v1630 = vmul.f32 %v1324, %v1598
  %v1631 = vmul.f32 %v1326, %v1599
  %v1632 = vmul.f32 %v1328, %v1600
  %v1633 = vmul.f32 %v1330, %v1601
  %v1634 = vmul.f32 %v1332, %v1602
  %v1635 = vmul.f32 %v1334, %v1603
  %v1636 = vmul.f32 %v1336, %v1604
  %v1637 = vmul.f32 %v1338, %v1605
  %v1638 = vmul.f32 %v1340, %v1606
  %v1639 = vmul.f32 %v1342, %v1607
  %v1640 = vmul.f32 %v1344, %v1608
  %v1641 = vmul.f32 %v1346, %v1609
  %v1642 = vmul.f32 %v1348, %v1610
  %v1643 = vmul.f32 %v1350, %v1611
  %v1644 = vmul.f32 %v1352, %v1612
  %v1645 = vmul.f32 %v1354, %v1613
  %v1646 = vmul.f32 %v1356, %v1614
  %v1647 = vmul.f32 %v1358, %v1615
  %v1648 = vmul.f32 %v1360, %v1616
  %1649 = vrot.lane.b32.xlu0 %v297, 64
  %v1650 = vpop.permute.xlu0 %1649
  %1651 = vrot.lane.b32.xlu0 %v319, 64
  %v1652 = vpop.permute.xlu0 %1651
  %1653 = vrot.lane.b32.xlu0 %v302, 64
  %v1654 = vpop.permute.xlu0 %1653
  %1655 = vrot.lane.b32.xlu0 %v368, 64
  %v1656 = vpop.permute.xlu0 %1655
  %1657 = vrot.lane.b32.xlu0 %v307, 64
  %v1658 = vpop.permute.xlu0 %1657
  %1659 = vrot.lane.b32.xlu0 %v417, 64
  %v1660 = vpop.permute.xlu0 %1659
  %1661 = vrot.lane.b32.xlu0 %v312, 64
  %v1662 = vpop.permute.xlu0 %1661
  %1663 = vrot.lane.b32.xlu0 %v466, 64
  %v1664 = vpop.permute.xlu0 %1663
  %v1673 = vmul.f32 %v1617, %v1650
  %v1674 = vmul.f32 %v1618, %v1650
  %v1675 = vmul.f32 %v1619, %v1650
  %v1676 = vmul.f32 %v1620, %v1650
  %v1677 = vmul.f32 %v1621, %v1652
  %v1678 = vmul.f32 %v1622, %v1652
  %v1679 = vmul.f32 %v1623, %v1652
  %v1680 = vmul.f32 %v1624, %v1652
  %v1681 = vmul.f32 %v1625, %v1654
  %v1682 = vmul.f32 %v1626, %v1654
  %v1683 = vmul.f32 %v1627, %v1654
  %v1684 = vmul.f32 %v1628, %v1654
  %v1685 = vmul.f32 %v1629, %v1656
  %v1686 = vmul.f32 %v1630, %v1656
  %v1687 = vmul.f32 %v1631, %v1656
  %v1688 = vmul.f32 %v1632, %v1656
  %v1689 = vmul.f32 %v1633, %v1658
  %v1690 = vmul.f32 %v1634, %v1658
  %v1691 = vmul.f32 %v1635, %v1658
  %v1692 = vmul.f32 %v1636, %v1658
  %v1693 = vmul.f32 %v1637, %v1660
  %v1694 = vmul.f32 %v1638, %v1660
  %v1695 = vmul.f32 %v1639, %v1660
  %v1696 = vmul.f32 %v1640, %v1660
  %v1697 = vmul.f32 %v1641, %v1662
  %v1698 = vmul.f32 %v1642, %v1662
  %v1699 = vmul.f32 %v1643, %v1662
  %v1700 = vmul.f32 %v1644, %v1662
  %v1701 = vmul.f32 %v1645, %v1664
  %v1702 = vmul.f32 %v1646, %v1664
  %v1703 = vmul.f32 %v1647, %v1664
  %v1704 = vmul.f32 %v1648, %v1664
  %v1705 = vsel %vm1040, %v1673, 0.0
  %v1706 = vrot.slane %v1705, 4
  %v1707 = vadd.f32 %v1705, %v1706
  %v1708 = vrot.slane %v1707, 2
  %v1709 = vadd.f32 %v1707, %v1708
  %v1710 = vrot.slane %v1709, 1
  %v1711 = vadd.f32 %v1709, %v1710
  %v1712 = vsel %vm1040, %v1674, 0.0
  %v1713 = vrot.slane %v1712, 4
  %v1714 = vadd.f32 %v1712, %v1713
  %v1715 = vrot.slane %v1714, 2
  %v1716 = vadd.f32 %v1714, %v1715
  %v1717 = vrot.slane %v1716, 1
  %v1718 = vadd.f32 %v1716, %v1717
  %v1719 = vsel %vm1040, %v1675, 0.0
  %v1720 = vrot.slane %v1719, 4
  %v1721 = vadd.f32 %v1719, %v1720
  %v1722 = vrot.slane %v1721, 2
  %v1723 = vadd.f32 %v1721, %v1722
  %v1724 = vrot.slane %v1723, 1
  %v1725 = vadd.f32 %v1723, %v1724
  %v1726 = vsel %vm1040, %v1676, 0.0
  %v1727 = vrot.slane %v1726, 4
  %v1728 = vadd.f32 %v1726, %v1727
  %v1729 = vrot.slane %v1728, 2
  %v1730 = vadd.f32 %v1728, %v1729
  %v1731 = vrot.slane %v1730, 1
  %v1732 = vadd.f32 %v1730, %v1731
  %v1733 = vsel %vm1040, %v1677, 0.0
  %v1734 = vrot.slane %v1733, 4
  %v1735 = vadd.f32 %v1733, %v1734
  %v1736 = vrot.slane %v1735, 2
  %v1737 = vadd.f32 %v1735, %v1736
  %v1738 = vrot.slane %v1737, 1
  %v1739 = vadd.f32 %v1737, %v1738
  %v1740 = vsel %vm1040, %v1678, 0.0
  %v1741 = vrot.slane %v1740, 4
  %v1742 = vadd.f32 %v1740, %v1741
  %v1743 = vrot.slane %v1742, 2
  %v1744 = vadd.f32 %v1742, %v1743
  %v1745 = vrot.slane %v1744, 1
  %v1746 = vadd.f32 %v1744, %v1745
  %v1747 = vsel %vm1040, %v1679, 0.0
  %v1748 = vrot.slane %v1747, 4
  %v1749 = vadd.f32 %v1747, %v1748
  %v1750 = vrot.slane %v1749, 2
  %v1751 = vadd.f32 %v1749, %v1750
  %v1752 = vrot.slane %v1751, 1
  %v1753 = vadd.f32 %v1751, %v1752
  %v1754 = vsel %vm1040, %v1680, 0.0
  %v1755 = vrot.slane %v1754, 4
  %v1756 = vadd.f32 %v1754, %v1755
  %v1757 = vrot.slane %v1756, 2
  %v1758 = vadd.f32 %v1756, %v1757
  %v1759 = vrot.slane %v1758, 1
  %v1760 = vadd.f32 %v1758, %v1759
  %v1761 = vsel %vm1040, %v1681, 0.0
  %v1762 = vrot.slane %v1761, 4
  %v1763 = vadd.f32 %v1761, %v1762
  %v1764 = vrot.slane %v1763, 2
  %v1765 = vadd.f32 %v1763, %v1764
  %v1766 = vrot.slane %v1765, 1
  %v1767 = vadd.f32 %v1765, %v1766
  %v1768 = vsel %vm1040, %v1682, 0.0
  %v1769 = vrot.slane %v1768, 4
  %v1770 = vadd.f32 %v1768, %v1769
  %v1771 = vrot.slane %v1770, 2
  %v1772 = vadd.f32 %v1770, %v1771
  %v1773 = vrot.slane %v1772, 1
  %v1774 = vadd.f32 %v1772, %v1773
  %v1775 = vsel %vm1040, %v1683, 0.0
  %v1776 = vrot.slane %v1775, 4
  %v1777 = vadd.f32 %v1775, %v1776
  %v1778 = vrot.slane %v1777, 2
  %v1779 = vadd.f32 %v1777, %v1778
  %v1780 = vrot.slane %v1779, 1
  %v1781 = vadd.f32 %v1779, %v1780
  %v1782 = vsel %vm1040, %v1684, 0.0
  %v1783 = vrot.slane %v1782, 4
  %v1784 = vadd.f32 %v1782, %v1783
  %v1785 = vrot.slane %v1784, 2
  %v1786 = vadd.f32 %v1784, %v1785
  %v1787 = vrot.slane %v1786, 1
  %v1788 = vadd.f32 %v1786, %v1787
  %v1789 = vsel %vm1040, %v1685, 0.0
  %v1790 = vrot.slane %v1789, 4
  %v1791 = vadd.f32 %v1789, %v1790
  %v1792 = vrot.slane %v1791, 2
  %v1793 = vadd.f32 %v1791, %v1792
  %v1794 = vrot.slane %v1793, 1
  %v1795 = vadd.f32 %v1793, %v1794
  %v1796 = vsel %vm1040, %v1686, 0.0
  %v1797 = vrot.slane %v1796, 4
  %v1798 = vadd.f32 %v1796, %v1797
  %v1799 = vrot.slane %v1798, 2
  %v1800 = vadd.f32 %v1798, %v1799
  %v1801 = vrot.slane %v1800, 1
  %v1802 = vadd.f32 %v1800, %v1801
  %v1803 = vsel %vm1040, %v1687, 0.0
  %v1804 = vrot.slane %v1803, 4
  %v1805 = vadd.f32 %v1803, %v1804
  %v1806 = vrot.slane %v1805, 2
  %v1807 = vadd.f32 %v1805, %v1806
  %v1808 = vrot.slane %v1807, 1
  %v1809 = vadd.f32 %v1807, %v1808
  %v1810 = vsel %vm1040, %v1688, 0.0
  %v1811 = vrot.slane %v1810, 4
  %v1812 = vadd.f32 %v1810, %v1811
  %v1813 = vrot.slane %v1812, 2
  %v1814 = vadd.f32 %v1812, %v1813
  %v1815 = vrot.slane %v1814, 1
  %v1816 = vadd.f32 %v1814, %v1815
  %v1817 = vsel %vm1040, %v1689, 0.0
  %v1818 = vrot.slane %v1817, 4
  %v1819 = vadd.f32 %v1817, %v1818
  %v1820 = vrot.slane %v1819, 2
  %v1821 = vadd.f32 %v1819, %v1820
  %v1822 = vrot.slane %v1821, 1
  %v1823 = vadd.f32 %v1821, %v1822
  %v1824 = vsel %vm1040, %v1690, 0.0
  %v1825 = vrot.slane %v1824, 4
  %v1826 = vadd.f32 %v1824, %v1825
  %v1827 = vrot.slane %v1826, 2
  %v1828 = vadd.f32 %v1826, %v1827
  %v1829 = vrot.slane %v1828, 1
  %v1830 = vadd.f32 %v1828, %v1829
  %v1831 = vsel %vm1040, %v1691, 0.0
  %v1832 = vrot.slane %v1831, 4
  %v1833 = vadd.f32 %v1831, %v1832
  %v1834 = vrot.slane %v1833, 2
  %v1835 = vadd.f32 %v1833, %v1834
  %v1836 = vrot.slane %v1835, 1
  %v1837 = vadd.f32 %v1835, %v1836
  %v1838 = vsel %vm1040, %v1692, 0.0
  %v1839 = vrot.slane %v1838, 4
  %v1840 = vadd.f32 %v1838, %v1839
  %v1841 = vrot.slane %v1840, 2
  %v1842 = vadd.f32 %v1840, %v1841
  %v1843 = vrot.slane %v1842, 1
  %v1844 = vadd.f32 %v1842, %v1843
  %v1845 = vsel %vm1040, %v1693, 0.0
  %v1846 = vrot.slane %v1845, 4
  %v1847 = vadd.f32 %v1845, %v1846
  %v1848 = vrot.slane %v1847, 2
  %v1849 = vadd.f32 %v1847, %v1848
  %v1850 = vrot.slane %v1849, 1
  %v1851 = vadd.f32 %v1849, %v1850
  %v1852 = vsel %vm1040, %v1694, 0.0
  %v1853 = vrot.slane %v1852, 4
  %v1854 = vadd.f32 %v1852, %v1853
  %v1855 = vrot.slane %v1854, 2
  %v1856 = vadd.f32 %v1854, %v1855
  %v1857 = vrot.slane %v1856, 1
  %v1858 = vadd.f32 %v1856, %v1857
  %v1859 = vsel %vm1040, %v1695, 0.0
  %v1860 = vrot.slane %v1859, 4
  %v1861 = vadd.f32 %v1859, %v1860
  %v1862 = vrot.slane %v1861, 2
  %v1863 = vadd.f32 %v1861, %v1862
  %v1864 = vrot.slane %v1863, 1
  %v1865 = vadd.f32 %v1863, %v1864
  %v1866 = vsel %vm1040, %v1696, 0.0
  %v1867 = vrot.slane %v1866, 4
  %v1868 = vadd.f32 %v1866, %v1867
  %v1869 = vrot.slane %v1868, 2
  %v1870 = vadd.f32 %v1868, %v1869
  %v1871 = vrot.slane %v1870, 1
  %v1872 = vadd.f32 %v1870, %v1871
  %v1873 = vsel %vm1040, %v1697, 0.0
  %v1874 = vrot.slane %v1873, 4
  %v1875 = vadd.f32 %v1873, %v1874
  %v1876 = vrot.slane %v1875, 2
  %v1877 = vadd.f32 %v1875, %v1876
  %v1878 = vrot.slane %v1877, 1
  %v1879 = vadd.f32 %v1877, %v1878
  %v1880 = vsel %vm1040, %v1698, 0.0
  %v1881 = vrot.slane %v1880, 4
  %v1882 = vadd.f32 %v1880, %v1881
  %v1883 = vrot.slane %v1882, 2
  %v1884 = vadd.f32 %v1882, %v1883
  %v1885 = vrot.slane %v1884, 1
  %v1886 = vadd.f32 %v1884, %v1885
  %v1887 = vsel %vm1040, %v1699, 0.0
  %v1888 = vrot.slane %v1887, 4
  %v1889 = vadd.f32 %v1887, %v1888
  %v1890 = vrot.slane %v1889, 2
  %v1891 = vadd.f32 %v1889, %v1890
  %v1892 = vrot.slane %v1891, 1
  %v1893 = vadd.f32 %v1891, %v1892
  %v1894 = vsel %vm1040, %v1700, 0.0
  %v1895 = vrot.slane %v1894, 4
  %v1896 = vadd.f32 %v1894, %v1895
  %v1897 = vrot.slane %v1896, 2
  %v1898 = vadd.f32 %v1896, %v1897
  %v1899 = vrot.slane %v1898, 1
  %v1900 = vadd.f32 %v1898, %v1899
  %v1901 = vsel %vm1040, %v1701, 0.0
  %v1902 = vrot.slane %v1901, 4
  %v1903 = vadd.f32 %v1901, %v1902
  %v1904 = vrot.slane %v1903, 2
  %v1905 = vadd.f32 %v1903, %v1904
  %v1906 = vrot.slane %v1905, 1
  %v1907 = vadd.f32 %v1905, %v1906
  %v1908 = vsel %vm1040, %v1702, 0.0
  %v1909 = vrot.slane %v1908, 4
  %v1910 = vadd.f32 %v1908, %v1909
  %v1911 = vrot.slane %v1910, 2
  %v1912 = vadd.f32 %v1910, %v1911
  %v1913 = vrot.slane %v1912, 1
  %v1914 = vadd.f32 %v1912, %v1913
  %v1915 = vsel %vm1040, %v1703, 0.0
  %v1916 = vrot.slane %v1915, 4
  %v1917 = vadd.f32 %v1915, %v1916
  %v1918 = vrot.slane %v1917, 2
  %v1919 = vadd.f32 %v1917, %v1918
  %v1920 = vrot.slane %v1919, 1
  %v1921 = vadd.f32 %v1919, %v1920
  %v1922 = vsel %vm1040, %v1704, 0.0
  %v1923 = vrot.slane %v1922, 4
  %v1924 = vadd.f32 %v1922, %v1923
  %v1925 = vrot.slane %v1924, 2
  %v1926 = vadd.f32 %v1924, %v1925
  %v1927 = vrot.slane %v1926, 1
  %v1928 = vadd.f32 %v1926, %v1927
  %v1929 = vld [vmem:[%s6] sm:$0xff]
  %v1930 = vld [vmem:[%s6 + $0x8] sm:$0xff]
  %v1931 = vld [vmem:[%s6 + $0x10] sm:$0xff]
  %v1932 = vld [vmem:[%s6 + $0x18] sm:$0xff]
  %v1933 = vld [vmem:[%s7] sm:$0x1]
  %v1935 = vlaneseq
  %v1936 = vshrl.u32 %v1935, 7
  %v1937 = vsub.s32 0, %v1936
  %v1938 = vrot.slane %v1933, %v1937
  %vm1972 = vcmask 1041409
  %v1973 = vsel %vm1972, %v1718, %v1711
  %vm1974 = vcmask 1042434
  %v1975 = vsel %vm1974, %v1725, %v1973
  %vm1976 = vcmask 1043459
  %v1977 = vsel %vm1976, %v1732, %v1975
  %vm1978 = vcmask 1044484
  %v1979 = vsel %vm1978, %v1739, %v1977
  %vm1980 = vcmask 1045509
  %v1981 = vsel %vm1980, %v1746, %v1979
  %vm1982 = vcmask 1046534
  %v1983 = vsel %vm1982, %v1753, %v1981
  %vm1984 = vcmask 1047559
  %v1985 = vsel %vm1984, %v1760, %v1983
  %v1986 = vsel %vm1972, %v1774, %v1767
  %v1987 = vsel %vm1974, %v1781, %v1986
  %v1988 = vsel %vm1976, %v1788, %v1987
  %v1989 = vsel %vm1978, %v1795, %v1988
  %v1990 = vsel %vm1980, %v1802, %v1989
  %v1991 = vsel %vm1982, %v1809, %v1990
  %v1992 = vsel %vm1984, %v1816, %v1991
  %v1993 = vsel %vm1972, %v1830, %v1823
  %v1994 = vsel %vm1974, %v1837, %v1993
  %v1995 = vsel %vm1976, %v1844, %v1994
  %v1996 = vsel %vm1978, %v1851, %v1995
  %v1997 = vsel %vm1980, %v1858, %v1996
  %v1998 = vsel %vm1982, %v1865, %v1997
  %v1999 = vsel %vm1984, %v1872, %v1998
  %v2000 = vsel %vm1972, %v1886, %v1879
  %v2001 = vsel %vm1974, %v1893, %v2000
  %v2002 = vsel %vm1976, %v1900, %v2001
  %v2003 = vsel %vm1978, %v1907, %v2002
  %v2004 = vsel %vm1980, %v1914, %v2003
  %v2005 = vsel %vm1982, %v1921, %v2004
  %v2006 = vsel %vm1984, %v1928, %v2005
  %v2007 = vsel %vm221, %v1985, 0
  %v2009 = vsel %vm221, %v1992, 0
  %v2011 = vsel %vm221, %v1999, 0
  %v2013 = vsel %vm221, %v2006, 0
  %2015 = vmatprep.subr.mxu0 0.0
  %2016 = vmatpush1.msra.mxu0 %v1929
  %2017 = vmatprep.subr.mxu0 0.0
  %2018 = vmatpush1.msra.mxu0 %v1930
  %2019 = vmatprep.subr.mxu0 0.0
  %2020 = vmatpush1.msra.mxu0 %v1931
  %2021 = vmatprep.subr.mxu0 0.0
  %2022 = vmatpush1.msra.mxu0 %v1932
  %2023 = vmatprep.subr.mxu0 0.0
  %2024 = vmatpush1.msra.mxu0 0.0
  %2025 = vmatprep.subr.mxu0 0.0
  %2026 = vmatpush1.msra.mxu0 0.0
  %2027 = vmatprep.subr.mxu0 0.0
  %2028 = vmatpush1.msra.mxu0 0.0
  %2029 = vmatprep.subr.mxu0 0.0
  %2030 = vmatpush1.msra.mxu0 0.0
  %2031 = vmatprep.subr.mxu0 0.0
  %2032 = vmatpush1.msra.mxu0 0.0
  %2033 = vmatprep.subr.mxu0 0.0
  %2034 = vmatpush1.msra.mxu0 0.0
  %2035 = vmatprep.subr.mxu0 0.0
  %2036 = vmatpush1.msra.mxu0 0.0
  %2037 = vmatprep.subr.mxu0 0.0
  %2038 = vmatpush1.msra.mxu0 0.0
  %2039 = vmatprep.subr.mxu0 0.0
  %2040 = vmatpush1.msra.mxu0 0.0
  %2041 = vmatprep.subr.mxu0 0.0
  %2042 = vmatpush1.msra.mxu0 0.0
  %2043 = vmatprep.subr.mxu0 0.0
  %2044 = vmatpush1.msra.mxu0 0.0
  %2045 = vmatprep.subr.mxu0 0.0
  %2046 = vmatpush1.msra.mxu0 0.0
  %2047 = vmatprep.subr.mxu0 0.0
  %2048 = vmatpush1.msra.mxu0 0.0
  %2049 = vmatprep.subr.mxu0 0.0
  %2050 = vmatpush1.msra.mxu0 0.0
  %2051 = vmatprep.subr.mxu0 0.0
  %2052 = vmatpush1.msra.mxu0 0.0
  %2053 = vmatprep.subr.mxu0 0.0
  %2054 = vmatpush1.msra.mxu0 0.0
  %2055 = vmatprep.subr.mxu0 0.0
  %2056 = vmatpush1.msra.mxu0 0.0
  %2057 = vmatprep.subr.mxu0 0.0
  %2058 = vmatpush1.msra.mxu0 0.0
  %2059 = vmatprep.subr.mxu0 0.0
  %2060 = vmatpush1.msra.mxu0 0.0
  %2061 = vmatprep.subr.mxu0 0.0
  %2062 = vmatpush1.msra.mxu0 0.0
  %2063 = vmatprep.subr.mxu0 0.0
  %2064 = vmatpush1.msra.mxu0 0.0
  %2065 = vmatprep.subr.mxu0 0.0
  %2066 = vmatpush1.msra.mxu0 0.0
  %2067 = vmatprep.subr.mxu0 0.0
  %2068 = vmatpush1.msra.mxu0 0.0
  %2069 = vmatprep.subr.mxu0 0.0
  %2070 = vmatpush1.msra.mxu0 0.0
  %2071 = vmatprep.subr.mxu0 0.0
  %2072 = vmatpush1.msra.mxu0 0.0
  %2073 = vmatprep.subr.mxu0 0.0
  %2074 = vmatpush1.msra.mxu0 0.0
  %2075 = vmatprep.subr.mxu0 0.0
  %2076 = vmatpush1.msra.mxu0 0.0
  %2077 = vmatprep.subr.mxu0 0.0
  %2078 = vmatpush1.msra.mxu0 0.0
  %2079 = vmatprep.mubr.f32.mxu0 0.0
  %2080 = vmatmul.mubr.f32.gmra.mrb[0].mxu0 %v2007
  %v2081 = vpop.f32.mrb[0].mxu0
  %v2082 = vadd.f32 %v1938, %v2081
  %v2083 = vpop.f32.mrb[0].mxu0
  %2084 = vmatprep.mubr.f32.mxu0 0.0
  %2085 = vmatmul.mubr.f32.gmra.mrb[0].mxu0 %v2009
  %v2086 = vpop.f32.mrb[0].mxu0
  %v2087 = vadd.f32 %v1938, %v2086
  %v2088 = vpop.f32.mrb[0].mxu0
  %2089 = vmatprep.mubr.f32.mxu0 0.0
  %2090 = vmatmul.mubr.f32.gmra.mrb[0].mxu0 %v2011
  %v2091 = vpop.f32.mrb[0].mxu0
  %v2092 = vadd.f32 %v1938, %v2091
  %v2093 = vpop.f32.mrb[0].mxu0
  %2094 = vmatprep.mubr.f32.mxu0 0.0
  %2095 = vmatmul.mubr.f32.gmra.mrb[0].mxu0 %v2013
  %v2096 = vpop.f32.mrb[0].mxu0
  %v2097 = vadd.f32 %v1938, %v2096
  %v2098 = vpop.f32.mrb[0].mxu0
  %2099 = vdwg.mxu0
  %v2104 = vcombine.high %v2082, %v2082
  %v2105 = vcombine.high %v2087, %v2087
  %v2106 = vcombine.high %v2092, %v2092
  %v2107 = vcombine.high %v2097, %v2097
  %v2112 = vadd.f32 %v190, %v2082
  %v2113 = vadd.f32 %v191, %v2104
  %v2114 = vadd.f32 %v192, %v2087
  %v2115 = vadd.f32 %v193, %v2105
  %v2116 = vadd.f32 %v194, %v2092
  %v2117 = vadd.f32 %v195, %v2106
  %v2118 = vadd.f32 %v196, %v2097
  %v2119 = vadd.f32 %v197, %v2107
  %v2120 = vld [vmem:[%s8] sm:$0x1]
  %v2121 = vld [vmem:[%s9] sm:$0x1]
  %v2130 = vcombine.low %v2112, %v2113
  %v2131 = vcombine.low %v2114, %v2115
  %v2132 = vcombine.low %v2116, %v2117
  %v2133 = vcombine.low %v2118, %v2119
  %v2138 = vsel %vm221, %v2130, 0.0
  %2139 = vadd.xlane.f32.xlu0 %v2138
  %v2140 = vpop.xlane.xlu0 %2139
  %v2141 = vsel %vm221, %v2131, 0.0
  %2142 = vadd.xlane.f32.xlu0 %v2141
  %v2143 = vpop.xlane.xlu0 %2142
  %v2144 = vsel %vm221, %v2132, 0.0
  %2145 = vadd.xlane.f32.xlu0 %v2144
  %v2146 = vpop.xlane.xlu0 %2145
  %v2147 = vsel %vm221, %v2133, 0.0
  %2148 = vadd.xlane.f32.xlu0 %v2147
  %v2149 = vpop.xlane.xlu0 %2148
  %v2150 = vrcp.pop 32.0
  %v2151 = vmul.f32 %v2140, %v2150
  %v2152 = vmul.f32 %v2143, %v2150
  %v2153 = vmul.f32 %v2146, %v2150
  %v2154 = vmul.f32 %v2149, %v2150
  %v2160 = vunpack.c.l.s4 839922192
  %v2161 = vunpack.c.0.s8 %v2160
  %v2162 = vlaneseq
  %v2163 = vshrl.u32 %v2162, 7
  %v2164 = vsub.s32 %v2161, %v2163
  %v2165 = vrot.slane %v2151, %v2164
  %v2167 = vunpack.c.l.s4 1985246804
  %v2168 = vunpack.c.0.s8 %v2167
  %v2169 = vlaneseq
  %v2170 = vshrl.u32 %v2169, 7
  %v2171 = vsub.s32 %v2168, %v2170
  %v2172 = vrot.slane %v2151, %v2171
  %v2174 = vunpack.c.l.s4 839922192
  %v2175 = vunpack.c.0.s8 %v2174
  %v2176 = vlaneseq
  %v2177 = vshrl.u32 %v2176, 7
  %v2178 = vsub.s32 %v2175, %v2177
  %v2179 = vrot.slane %v2152, %v2178
  %v2181 = vunpack.c.l.s4 1985246804
  %v2182 = vunpack.c.0.s8 %v2181
  %v2183 = vlaneseq
  %v2184 = vshrl.u32 %v2183, 7
  %v2185 = vsub.s32 %v2182, %v2184
  %v2186 = vrot.slane %v2152, %v2185
  %v2188 = vunpack.c.l.s4 839922192
  %v2189 = vunpack.c.0.s8 %v2188
  %v2190 = vlaneseq
  %v2191 = vshrl.u32 %v2190, 7
  %v2192 = vsub.s32 %v2189, %v2191
  %v2193 = vrot.slane %v2153, %v2192
  %v2195 = vunpack.c.l.s4 1985246804
  %v2196 = vunpack.c.0.s8 %v2195
  %v2197 = vlaneseq
  %v2198 = vshrl.u32 %v2197, 7
  %v2199 = vsub.s32 %v2196, %v2198
  %v2200 = vrot.slane %v2153, %v2199
  %v2202 = vunpack.c.l.s4 839922192
  %v2203 = vunpack.c.0.s8 %v2202
  %v2204 = vlaneseq
  %v2205 = vshrl.u32 %v2204, 7
  %v2206 = vsub.s32 %v2203, %v2205
  %v2207 = vrot.slane %v2154, %v2206
  %v2209 = vunpack.c.l.s4 1985246804
  %v2210 = vunpack.c.0.s8 %v2209
  %v2211 = vlaneseq
  %v2212 = vshrl.u32 %v2211, 7
  %v2213 = vsub.s32 %v2210, %v2212
  %v2214 = vrot.slane %v2154, %v2213
  %v2223 = vsub.f32 %v2112, %v2165
  %v2224 = vsub.f32 %v2113, %v2172
  %v2225 = vsub.f32 %v2114, %v2179
  %v2226 = vsub.f32 %v2115, %v2186
  %v2227 = vsub.f32 %v2116, %v2193
  %v2228 = vsub.f32 %v2117, %v2200
  %v2229 = vsub.f32 %v2118, %v2207
  %v2230 = vsub.f32 %v2119, %v2214
  %v2231 = vmul.f32 %v2223, %v2223
  %v2232 = vmul.f32 %v2224, %v2224
  %v2233 = vmul.f32 %v2225, %v2225
  %v2234 = vmul.f32 %v2226, %v2226
  %v2235 = vmul.f32 %v2227, %v2227
  %v2236 = vmul.f32 %v2228, %v2228
  %v2237 = vmul.f32 %v2229, %v2229
  %v2238 = vmul.f32 %v2230, %v2230
  %v2247 = vcombine.low %v2231, %v2232
  %v2248 = vcombine.low %v2233, %v2234
  %v2249 = vcombine.low %v2235, %v2236
  %v2250 = vcombine.low %v2237, %v2238
  %v2255 = vsel %vm221, %v2247, 0.0
  %2256 = vadd.xlane.f32.xlu0 %v2255
  %v2257 = vpop.xlane.xlu0 %2256
  %v2258 = vsel %vm221, %v2248, 0.0
  %2259 = vadd.xlane.f32.xlu0 %v2258
  %v2260 = vpop.xlane.xlu0 %2259
  %v2261 = vsel %vm221, %v2249, 0.0
  %2262 = vadd.xlane.f32.xlu0 %v2261
  %v2263 = vpop.xlane.xlu0 %2262
  %v2264 = vsel %vm221, %v2250, 0.0
  %2265 = vadd.xlane.f32.xlu0 %v2264
  %v2266 = vpop.xlane.xlu0 %2265
  %v2267 = vmul.f32 %v2257, %v2150
  %v2268 = vmul.f32 %v2260, %v2150
  %v2269 = vmul.f32 %v2263, %v2150
  %v2270 = vmul.f32 %v2266, %v2150
  %v2271 = vadd.f32 %v2267, 1e-05
  %v2272 = vadd.f32 %v2268, 1e-05
  %v2273 = vadd.f32 %v2269, 1e-05
  %v2274 = vadd.f32 %v2270, 1e-05
  %v2275 = vrsqrt.pop %v2271
  %v2276 = vrsqrt.pop %v2272
  %v2277 = vrsqrt.pop %v2273
  %v2278 = vrsqrt.pop %v2274
  %v2284 = vunpack.c.l.s4 839922192
  %v2285 = vunpack.c.0.s8 %v2284
  %v2286 = vlaneseq
  %v2287 = vshrl.u32 %v2286, 7
  %v2288 = vsub.s32 %v2285, %v2287
  %v2289 = vrot.slane %v2275, %v2288
  %v2291 = vunpack.c.l.s4 1985246804
  %v2292 = vunpack.c.0.s8 %v2291
  %v2293 = vlaneseq
  %v2294 = vshrl.u32 %v2293, 7
  %v2295 = vsub.s32 %v2292, %v2294
  %v2296 = vrot.slane %v2275, %v2295
  %v2298 = vunpack.c.l.s4 839922192
  %v2299 = vunpack.c.0.s8 %v2298
  %v2300 = vlaneseq
  %v2301 = vshrl.u32 %v2300, 7
  %v2302 = vsub.s32 %v2299, %v2301
  %v2303 = vrot.slane %v2276, %v2302
  %v2305 = vunpack.c.l.s4 1985246804
  %v2306 = vunpack.c.0.s8 %v2305
  %v2307 = vlaneseq
  %v2308 = vshrl.u32 %v2307, 7
  %v2309 = vsub.s32 %v2306, %v2308
  %v2310 = vrot.slane %v2276, %v2309
  %v2312 = vunpack.c.l.s4 839922192
  %v2313 = vunpack.c.0.s8 %v2312
  %v2314 = vlaneseq
  %v2315 = vshrl.u32 %v2314, 7
  %v2316 = vsub.s32 %v2313, %v2315
  %v2317 = vrot.slane %v2277, %v2316
  %v2319 = vunpack.c.l.s4 1985246804
  %v2320 = vunpack.c.0.s8 %v2319
  %v2321 = vlaneseq
  %v2322 = vshrl.u32 %v2321, 7
  %v2323 = vsub.s32 %v2320, %v2322
  %v2324 = vrot.slane %v2277, %v2323
  %v2326 = vunpack.c.l.s4 839922192
  %v2327 = vunpack.c.0.s8 %v2326
  %v2328 = vlaneseq
  %v2329 = vshrl.u32 %v2328, 7
  %v2330 = vsub.s32 %v2327, %v2329
  %v2331 = vrot.slane %v2278, %v2330
  %v2333 = vunpack.c.l.s4 1985246804
  %v2334 = vunpack.c.0.s8 %v2333
  %v2335 = vlaneseq
  %v2336 = vshrl.u32 %v2335, 7
  %v2337 = vsub.s32 %v2334, %v2336
  %v2338 = vrot.slane %v2278, %v2337
  %v2347 = vmul.f32 %v2223, %v2289
  %v2348 = vmul.f32 %v2224, %v2296
  %v2349 = vmul.f32 %v2225, %v2303
  %v2350 = vmul.f32 %v2226, %v2310
  %v2351 = vmul.f32 %v2227, %v2317
  %v2352 = vmul.f32 %v2228, %v2324
  %v2353 = vmul.f32 %v2229, %v2331
  %v2354 = vmul.f32 %v2230, %v2338
  %v2356 = vlaneseq
  %v2357 = vshrl.u32 %v2356, 7
  %v2358 = vsub.s32 0, %v2357
  %v2359 = vrot.slane %v2120, %v2358
  %v2361 = vcombine.high %v2359, %v2359
  %v2363 = vmul.f32 %v2347, %v2359
  %v2364 = vmul.f32 %v2348, %v2361
  %v2365 = vmul.f32 %v2349, %v2359
  %v2366 = vmul.f32 %v2350, %v2361
  %v2367 = vmul.f32 %v2351, %v2359
  %v2368 = vmul.f32 %v2352, %v2361
  %v2369 = vmul.f32 %v2353, %v2359
  %v2370 = vmul.f32 %v2354, %v2361
  %v2372 = vlaneseq
  %v2373 = vshrl.u32 %v2372, 7
  %v2374 = vsub.s32 0, %v2373
  %v2375 = vrot.slane %v2121, %v2374
  %v2377 = vcombine.high %v2375, %v2375
  %v2379 = vadd.f32 %v2363, %v2375
  %v2380 = vadd.f32 %v2364, %v2377
  %v2381 = vadd.f32 %v2365, %v2375
  %v2382 = vadd.f32 %v2366, %v2377
  %v2383 = vadd.f32 %v2367, %v2375
  %v2384 = vadd.f32 %v2368, %v2377
  %v2385 = vadd.f32 %v2369, %v2375
  %v2386 = vadd.f32 %v2370, %v2377
  %v2387 = vld [vmem:[%s10] sm:$0xff]
  %v2388 = vld [vmem:[%s10 + $0x8] sm:$0xff]
  %v2389 = vld [vmem:[%s10 + $0x10] sm:$0xff]
  %v2390 = vld [vmem:[%s10 + $0x18] sm:$0xff]
  %v2391 = vld [vmem:[%s11] sm:$0x1]
  %v2393 = vlaneseq
  %v2394 = vshrl.u32 %v2393, 7
  %v2395 = vsub.s32 0, %v2394
  %v2396 = vrot.slane %v2391, %v2395
  %v2406 = vcombine.low %v2379, %v2380
  %v2407 = vcombine.low %v2381, %v2382
  %v2408 = vcombine.low %v2383, %v2384
  %v2409 = vcombine.low %v2385, %v2386
  %v2410 = vsel %vm221, %v2406, 0
  %v2412 = vsel %vm221, %v2407, 0
  %v2414 = vsel %vm221, %v2408, 0
  %v2416 = vsel %vm221, %v2409, 0
  %2418 = vmatprep.subr.mxu0 0.0
  %2419 = vmatpush1.msra.mxu0 %v2387
  %2420 = vmatprep.subr.mxu0 0.0
  %2421 = vmatpush1.msra.mxu0 %v2388
  %2422 = vmatprep.subr.mxu0 0.0
  %2423 = vmatpush1.msra.mxu0 %v2389
  %2424 = vmatprep.subr.mxu0 0.0
  %2425 = vmatpush1.msra.mxu0 %v2390
  %2426 = vmatprep.subr.mxu0 0.0
  %2427 = vmatpush1.msra.mxu0 0.0
  %2428 = vmatprep.subr.mxu0 0.0
  %2429 = vmatpush1.msra.mxu0 0.0
  %2430 = vmatprep.subr.mxu0 0.0
  %2431 = vmatpush1.msra.mxu0 0.0
  %2432 = vmatprep.subr.mxu0 0.0
  %2433 = vmatpush1.msra.mxu0 0.0
  %2434 = vmatprep.subr.mxu0 0.0
  %2435 = vmatpush1.msra.mxu0 0.0
  %2436 = vmatprep.subr.mxu0 0.0
  %2437 = vmatpush1.msra.mxu0 0.0
  %2438 = vmatprep.subr.mxu0 0.0
  %2439 = vmatpush1.msra.mxu0 0.0
  %2440 = vmatprep.subr.mxu0 0.0
  %2441 = vmatpush1.msra.mxu0 0.0
  %2442 = vmatprep.subr.mxu0 0.0
  %2443 = vmatpush1.msra.mxu0 0.0
  %2444 = vmatprep.subr.mxu0 0.0
  %2445 = vmatpush1.msra.mxu0 0.0
  %2446 = vmatprep.subr.mxu0 0.0
  %2447 = vmatpush1.msra.mxu0 0.0
  %2448 = vmatprep.subr.mxu0 0.0
  %2449 = vmatpush1.msra.mxu0 0.0
  %2450 = vmatprep.subr.mxu0 0.0
  %2451 = vmatpush1.msra.mxu0 0.0
  %2452 = vmatprep.subr.mxu0 0.0
  %2453 = vmatpush1.msra.mxu0 0.0
  %2454 = vmatprep.subr.mxu0 0.0
  %2455 = vmatpush1.msra.mxu0 0.0
  %2456 = vmatprep.subr.mxu0 0.0
  %2457 = vmatpush1.msra.mxu0 0.0
  %2458 = vmatprep.subr.mxu0 0.0
  %2459 = vmatpush1.msra.mxu0 0.0
  %2460 = vmatprep.subr.mxu0 0.0
  %2461 = vmatpush1.msra.mxu0 0.0
  %2462 = vmatprep.subr.mxu0 0.0
  %2463 = vmatpush1.msra.mxu0 0.0
  %2464 = vmatprep.subr.mxu0 0.0
  %2465 = vmatpush1.msra.mxu0 0.0
  %2466 = vmatprep.subr.mxu0 0.0
  %2467 = vmatpush1.msra.mxu0 0.0
  %2468 = vmatprep.subr.mxu0 0.0
  %2469 = vmatpush1.msra.mxu0 0.0
  %2470 = vmatprep.subr.mxu0 0.0
  %2471 = vmatpush1.msra.mxu0 0.0
  %2472 = vmatprep.subr.mxu0 0.0
  %2473 = vmatpush1.msra.mxu0 0.0
  %2474 = vmatprep.subr.mxu0 0.0
  %2475 = vmatpush1.msra.mxu0 0.0
  %2476 = vmatprep.subr.mxu0 0.0
  %2477 = vmatpush1.msra.mxu0 0.0
  %2478 = vmatprep.subr.mxu0 0.0
  %2479 = vmatpush1.msra.mxu0 0.0
  %2480 = vmatprep.subr.mxu0 0.0
  %2481 = vmatpush1.msra.mxu0 0.0
  %2482 = vmatprep.mubr.f32.mxu0 0.0
  %2483 = vmatmul.mubr.f32.gmra.mrb[0].mxu0 %v2410
  %v2484 = vpop.f32.mrb[0].mxu0
  %v2485 = vadd.f32 %v2396, %v2484
  %v2486 = vpop.f32.mrb[0].mxu0
  %2487 = vmatprep.mubr.f32.mxu0 0.0
  %2488 = vmatmul.mubr.f32.gmra.mrb[0].mxu0 %v2412
  %v2489 = vpop.f32.mrb[0].mxu0
  %v2490 = vadd.f32 %v2396, %v2489
  %v2491 = vpop.f32.mrb[0].mxu0
  %2492 = vmatprep.mubr.f32.mxu0 0.0
  %2493 = vmatmul.mubr.f32.gmra.mrb[0].mxu0 %v2414
  %v2494 = vpop.f32.mrb[0].mxu0
  %v2495 = vadd.f32 %v2396, %v2494
  %v2496 = vpop.f32.mrb[0].mxu0
  %2497 = vmatprep.mubr.f32.mxu0 0.0
  %2498 = vmatmul.mubr.f32.gmra.mrb[0].mxu0 %v2416
  %v2499 = vpop.f32.mrb[0].mxu0
  %v2500 = vadd.f32 %v2396, %v2499
  %v2501 = vpop.f32.mrb[0].mxu0
  %2502 = vdwg.mxu0
  %v2503 = vmax.f32 %v2485, 0.0
  %v2504 = vmax.f32 %v2490, 0.0
  %v2505 = vmax.f32 %v2495, 0.0
  %v2506 = vmax.f32 %v2500, 0.0
  %v2507 = vld [vmem:[%s12] sm:$0xff]
  %v2508 = vld [vmem:[%s12 + $0x8] sm:$0xff]
  %v2509 = vld [vmem:[%s12 + $0x10] sm:$0xff]
  %v2510 = vld [vmem:[%s12 + $0x18] sm:$0xff]
  %v2511 = vld [vmem:[%s12 + $0x20] sm:$0xff]
  %v2512 = vld [vmem:[%s12 + $0x28] sm:$0xff]
  %v2513 = vld [vmem:[%s12 + $0x30] sm:$0xff]
  %v2514 = vld [vmem:[%s12 + $0x38] sm:$0xff]
  %v2515 = vld [vmem:[%s12 + $0x40] sm:$0xff]
  %v2516 = vld [vmem:[%s12 + $0x48] sm:$0xff]
  %v2517 = vld [vmem:[%s12 + $0x50] sm:$0xff]
  %v2518 = vld [vmem:[%s12 + $0x58] sm:$0xff]
  %v2519 = vld [vmem:[%s12 + $0x60] sm:$0xff]
  %v2520 = vld [vmem:[%s12 + $0x68] sm:$0xff]
  %v2521 = vld [vmem:[%s12 + $0x70] sm:$0xff]
  %v2522 = vld [vmem:[%s12 + $0x78] sm:$0xff]
  %v2523 = vld [vmem:[%s13] sm:$0x1]
  %v2525 = vlaneseq
  %v2526 = vshrl.u32 %v2525, 7
  %v2527 = vsub.s32 0, %v2526
  %v2528 = vrot.slane %v2523, %v2527
  %2530 = vmatprep.subr.mxu0 0.0
  %2531 = vmatpush1.msra.mxu0 %v2507
  %2532 = vmatprep.subr.mxu0 0.0
  %2533 = vmatpush1.msra.mxu0 %v2508
  %2534 = vmatprep.subr.mxu0 0.0
  %2535 = vmatpush1.msra.mxu0 %v2509
  %2536 = vmatprep.subr.mxu0 0.0
  %2537 = vmatpush1.msra.mxu0 %v2510
  %2538 = vmatprep.subr.mxu0 0.0
  %2539 = vmatpush1.msra.mxu0 %v2511
  %2540 = vmatprep.subr.mxu0 0.0
  %2541 = vmatpush1.msra.mxu0 %v2512
  %2542 = vmatprep.subr.mxu0 0.0
  %2543 = vmatpush1.msra.mxu0 %v2513
  %2544 = vmatprep.subr.mxu0 0.0
  %2545 = vmatpush1.msra.mxu0 %v2514
  %2546 = vmatprep.subr.mxu0 0.0
  %2547 = vmatpush1.msra.mxu0 %v2515
  %2548 = vmatprep.subr.mxu0 0.0
  %2549 = vmatpush1.msra.mxu0 %v2516
  %2550 = vmatprep.subr.mxu0 0.0
  %2551 = vmatpush1.msra.mxu0 %v2517
  %2552 = vmatprep.subr.mxu0 0.0
  %2553 = vmatpush1.msra.mxu0 %v2518
  %2554 = vmatprep.subr.mxu0 0.0
  %2555 = vmatpush1.msra.mxu0 %v2519
  %2556 = vmatprep.subr.mxu0 0.0
  %2557 = vmatpush1.msra.mxu0 %v2520
  %2558 = vmatprep.subr.mxu0 0.0
  %2559 = vmatpush1.msra.mxu0 %v2521
  %2560 = vmatprep.subr.mxu0 0.0
  %2561 = vmatpush1.msra.mxu0 %v2522
  %2562 = vmatprep.subr.mxu0 0.0
  %2563 = vmatpush1.msra.mxu0 0.0
  %2564 = vmatprep.subr.mxu0 0.0
  %2565 = vmatpush1.msra.mxu0 0.0
  %2566 = vmatprep.subr.mxu0 0.0
  %2567 = vmatpush1.msra.mxu0 0.0
  %2568 = vmatprep.subr.mxu0 0.0
  %2569 = vmatpush1.msra.mxu0 0.0
  %2570 = vmatprep.subr.mxu0 0.0
  %2571 = vmatpush1.msra.mxu0 0.0
  %2572 = vmatprep.subr.mxu0 0.0
  %2573 = vmatpush1.msra.mxu0 0.0
  %2574 = vmatprep.subr.mxu0 0.0
  %2575 = vmatpush1.msra.mxu0 0.0
  %2576 = vmatprep.subr.mxu0 0.0
  %2577 = vmatpush1.msra.mxu0 0.0
  %2578 = vmatprep.subr.mxu0 0.0
  %2579 = vmatpush1.msra.mxu0 0.0
  %2580 = vmatprep.subr.mxu0 0.0
  %2581 = vmatpush1.msra.mxu0 0.0
  %2582 = vmatprep.subr.mxu0 0.0
  %2583 = vmatpush1.msra.mxu0 0.0
  %2584 = vmatprep.subr.mxu0 0.0
  %2585 = vmatpush1.msra.mxu0 0.0
  %2586 = vmatprep.subr.mxu0 0.0
  %2587 = vmatpush1.msra.mxu0 0.0
  %2588 = vmatprep.subr.mxu0 0.0
  %2589 = vmatpush1.msra.mxu0 0.0
  %2590 = vmatprep.subr.mxu0 0.0
  %2591 = vmatpush1.msra.mxu0 0.0
  %2592 = vmatprep.subr.mxu0 0.0
  %2593 = vmatpush1.msra.mxu0 0.0
  %2594 = vmatprep.mubr.f32.mxu0 0.0
  %2595 = vmatmul.mubr.f32.gmra.mrb[0].mxu0 %v2503
  %v2596 = vpop.f32.mrb[0].mxu0
  %v2597 = vadd.f32 %v2528, %v2596
  %v2598 = vpop.f32.mrb[0].mxu0
  %2599 = vmatprep.mubr.f32.mxu0 0.0
  %2600 = vmatmul.mubr.f32.gmra.mrb[0].mxu0 %v2504
  %v2601 = vpop.f32.mrb[0].mxu0
  %v2602 = vadd.f32 %v2528, %v2601
  %v2603 = vpop.f32.mrb[0].mxu0
  %2604 = vmatprep.mubr.f32.mxu0 0.0
  %2605 = vmatmul.mubr.f32.gmra.mrb[0].mxu0 %v2505
  %v2606 = vpop.f32.mrb[0].mxu0
  %v2607 = vadd.f32 %v2528, %v2606
  %v2608 = vpop.f32.mrb[0].mxu0
  %2609 = vmatprep.mubr.f32.mxu0 0.0
  %2610 = vmatmul.mubr.f32.gmra.mrb[0].mxu0 %v2506
  %v2611 = vpop.f32.mrb[0].mxu0
  %v2612 = vadd.f32 %v2528, %v2611
  %v2613 = vpop.f32.mrb[0].mxu0
  %2614 = vdwg.mxu0
  %v2619 = vcombine.high %v2597, %v2597
  %v2620 = vcombine.high %v2602, %v2602
  %v2621 = vcombine.high %v2607, %v2607
  %v2622 = vcombine.high %v2612, %v2612
  %v2627 = vadd.f32 %v2379, %v2597
  %v2628 = vadd.f32 %v2380, %v2619
  %v2629 = vadd.f32 %v2381, %v2602
  %v2630 = vadd.f32 %v2382, %v2620
  %v2631 = vadd.f32 %v2383, %v2607
  %v2632 = vadd.f32 %v2384, %v2621
  %v2633 = vadd.f32 %v2385, %v2612
  %v2634 = vadd.f32 %v2386, %v2622
  %v2635 = vld [vmem:[%s14] sm:$0x1]
  %v2636 = vld [vmem:[%s15] sm:$0x1]
  %v2645 = vcombine.low %v2627, %v2628
  %v2646 = vcombine.low %v2629, %v2630
  %v2647 = vcombine.low %v2631, %v2632
  %v2648 = vcombine.low %v2633, %v2634
  %v2653 = vsel %vm221, %v2645, 0.0
  %2654 = vadd.xlane.f32.xlu0 %v2653
  %v2655 = vpop.xlane.xlu0 %2654
  %v2656 = vsel %vm221, %v2646, 0.0
  %2657 = vadd.xlane.f32.xlu0 %v2656
  %v2658 = vpop.xlane.xlu0 %2657
  %v2659 = vsel %vm221, %v2647, 0.0
  %2660 = vadd.xlane.f32.xlu0 %v2659
  %v2661 = vpop.xlane.xlu0 %2660
  %v2662 = vsel %vm221, %v2648, 0.0
  %2663 = vadd.xlane.f32.xlu0 %v2662
  %v2664 = vpop.xlane.xlu0 %2663
  %v2665 = vmul.f32 %v2655, %v2150
  %v2666 = vmul.f32 %v2658, %v2150
  %v2667 = vmul.f32 %v2661, %v2150
  %v2668 = vmul.f32 %v2664, %v2150
  %v2674 = vunpack.c.l.s4 839922192
  %v2675 = vunpack.c.0.s8 %v2674
  %v2676 = vlaneseq
  %v2677 = vshrl.u32 %v2676, 7
  %v2678 = vsub.s32 %v2675, %v2677
  %v2679 = vrot.slane %v2665, %v2678
  %v2681 = vunpack.c.l.s4 1985246804
  %v2682 = vunpack.c.0.s8 %v2681
  %v2683 = vlaneseq
  %v2684 = vshrl.u32 %v2683, 7
  %v2685 = vsub.s32 %v2682, %v2684
  %v2686 = vrot.slane %v2665, %v2685
  %v2688 = vunpack.c.l.s4 839922192
  %v2689 = vunpack.c.0.s8 %v2688
  %v2690 = vlaneseq
  %v2691 = vshrl.u32 %v2690, 7
  %v2692 = vsub.s32 %v2689, %v2691
  %v2693 = vrot.slane %v2666, %v2692
  %v2695 = vunpack.c.l.s4 1985246804
  %v2696 = vunpack.c.0.s8 %v2695
  %v2697 = vlaneseq
  %v2698 = vshrl.u32 %v2697, 7
  %v2699 = vsub.s32 %v2696, %v2698
  %v2700 = vrot.slane %v2666, %v2699
  %v2702 = vunpack.c.l.s4 839922192
  %v2703 = vunpack.c.0.s8 %v2702
  %v2704 = vlaneseq
  %v2705 = vshrl.u32 %v2704, 7
  %v2706 = vsub.s32 %v2703, %v2705
  %v2707 = vrot.slane %v2667, %v2706
  %v2709 = vunpack.c.l.s4 1985246804
  %v2710 = vunpack.c.0.s8 %v2709
  %v2711 = vlaneseq
  %v2712 = vshrl.u32 %v2711, 7
  %v2713 = vsub.s32 %v2710, %v2712
  %v2714 = vrot.slane %v2667, %v2713
  %v2716 = vunpack.c.l.s4 839922192
  %v2717 = vunpack.c.0.s8 %v2716
  %v2718 = vlaneseq
  %v2719 = vshrl.u32 %v2718, 7
  %v2720 = vsub.s32 %v2717, %v2719
  %v2721 = vrot.slane %v2668, %v2720
  %v2723 = vunpack.c.l.s4 1985246804
  %v2724 = vunpack.c.0.s8 %v2723
  %v2725 = vlaneseq
  %v2726 = vshrl.u32 %v2725, 7
  %v2727 = vsub.s32 %v2724, %v2726
  %v2728 = vrot.slane %v2668, %v2727
  %v2737 = vsub.f32 %v2627, %v2679
  %v2738 = vsub.f32 %v2628, %v2686
  %v2739 = vsub.f32 %v2629, %v2693
  %v2740 = vsub.f32 %v2630, %v2700
  %v2741 = vsub.f32 %v2631, %v2707
  %v2742 = vsub.f32 %v2632, %v2714
  %v2743 = vsub.f32 %v2633, %v2721
  %v2744 = vsub.f32 %v2634, %v2728
  %v2745 = vmul.f32 %v2737, %v2737
  %v2746 = vmul.f32 %v2738, %v2738
  %v2747 = vmul.f32 %v2739, %v2739
  %v2748 = vmul.f32 %v2740, %v2740
  %v2749 = vmul.f32 %v2741, %v2741
  %v2750 = vmul.f32 %v2742, %v2742
  %v2751 = vmul.f32 %v2743, %v2743
  %v2752 = vmul.f32 %v2744, %v2744
  %v2761 = vcombine.low %v2745, %v2746
  %v2762 = vcombine.low %v2747, %v2748
  %v2763 = vcombine.low %v2749, %v2750
  %v2764 = vcombine.low %v2751, %v2752
  %v2769 = vsel %vm221, %v2761, 0.0
  %2770 = vadd.xlane.f32.xlu0 %v2769
  %v2771 = vpop.xlane.xlu0 %2770
  %v2772 = vsel %vm221, %v2762, 0.0
  %2773 = vadd.xlane.f32.xlu0 %v2772
  %v2774 = vpop.xlane.xlu0 %2773
  %v2775 = vsel %vm221, %v2763, 0.0
  %2776 = vadd.xlane.f32.xlu0 %v2775
  %v2777 = vpop.xlane.xlu0 %2776
  %v2778 = vsel %vm221, %v2764, 0.0
  %2779 = vadd.xlane.f32.xlu0 %v2778
  %v2780 = vpop.xlane.xlu0 %2779
  %v2781 = vmul.f32 %v2771, %v2150
  %v2782 = vmul.f32 %v2774, %v2150
  %v2783 = vmul.f32 %v2777, %v2150
  %v2784 = vmul.f32 %v2780, %v2150
  %v2785 = vadd.f32 %v2781, 1e-05
  %v2786 = vadd.f32 %v2782, 1e-05
  %v2787 = vadd.f32 %v2783, 1e-05
  %v2788 = vadd.f32 %v2784, 1e-05
  %v2789 = vrsqrt.pop %v2785
  %v2790 = vrsqrt.pop %v2786
  %v2791 = vrsqrt.pop %v2787
  %v2792 = vrsqrt.pop %v2788
  %v2798 = vunpack.c.l.s4 839922192
  %v2799 = vunpack.c.0.s8 %v2798
  %v2800 = vlaneseq
  %v2801 = vshrl.u32 %v2800, 7
  %v2802 = vsub.s32 %v2799, %v2801
  %v2803 = vrot.slane %v2789, %v2802
  %v2805 = vunpack.c.l.s4 1985246804
  %v2806 = vunpack.c.0.s8 %v2805
  %v2807 = vlaneseq
  %v2808 = vshrl.u32 %v2807, 7
  %v2809 = vsub.s32 %v2806, %v2808
  %v2810 = vrot.slane %v2789, %v2809
  %v2812 = vunpack.c.l.s4 839922192
  %v2813 = vunpack.c.0.s8 %v2812
  %v2814 = vlaneseq
  %v2815 = vshrl.u32 %v2814, 7
  %v2816 = vsub.s32 %v2813, %v2815
  %v2817 = vrot.slane %v2790, %v2816
  %v2819 = vunpack.c.l.s4 1985246804
  %v2820 = vunpack.c.0.s8 %v2819
  %v2821 = vlaneseq
  %v2822 = vshrl.u32 %v2821, 7
  %v2823 = vsub.s32 %v2820, %v2822
  %v2824 = vrot.slane %v2790, %v2823
  %v2826 = vunpack.c.l.s4 839922192
  %v2827 = vunpack.c.0.s8 %v2826
  %v2828 = vlaneseq
  %v2829 = vshrl.u32 %v2828, 7
  %v2830 = vsub.s32 %v2827, %v2829
  %v2831 = vrot.slane %v2791, %v2830
  %v2833 = vunpack.c.l.s4 1985246804
  %v2834 = vunpack.c.0.s8 %v2833
  %v2835 = vlaneseq
  %v2836 = vshrl.u32 %v2835, 7
  %v2837 = vsub.s32 %v2834, %v2836
  %v2838 = vrot.slane %v2791, %v2837
  %v2840 = vunpack.c.l.s4 839922192
  %v2841 = vunpack.c.0.s8 %v2840
  %v2842 = vlaneseq
  %v2843 = vshrl.u32 %v2842, 7
  %v2844 = vsub.s32 %v2841, %v2843
  %v2845 = vrot.slane %v2792, %v2844
  %v2847 = vunpack.c.l.s4 1985246804
  %v2848 = vunpack.c.0.s8 %v2847
  %v2849 = vlaneseq
  %v2850 = vshrl.u32 %v2849, 7
  %v2851 = vsub.s32 %v2848, %v2850
  %v2852 = vrot.slane %v2792, %v2851
  %v2861 = vmul.f32 %v2737, %v2803
  %v2862 = vmul.f32 %v2738, %v2810
  %v2863 = vmul.f32 %v2739, %v2817
  %v2864 = vmul.f32 %v2740, %v2824
  %v2865 = vmul.f32 %v2741, %v2831
  %v2866 = vmul.f32 %v2742, %v2838
  %v2867 = vmul.f32 %v2743, %v2845
  %v2868 = vmul.f32 %v2744, %v2852
  %v2870 = vlaneseq
  %v2871 = vshrl.u32 %v2870, 7
  %v2872 = vsub.s32 0, %v2871
  %v2873 = vrot.slane %v2635, %v2872
  %v2875 = vcombine.high %v2873, %v2873
  %v2877 = vmul.f32 %v2861, %v2873
  %v2878 = vmul.f32 %v2862, %v2875
  %v2879 = vmul.f32 %v2863, %v2873
  %v2880 = vmul.f32 %v2864, %v2875
  %v2881 = vmul.f32 %v2865, %v2873
  %v2882 = vmul.f32 %v2866, %v2875
  %v2883 = vmul.f32 %v2867, %v2873
  %v2884 = vmul.f32 %v2868, %v2875
  %v2886 = vlaneseq
  %v2887 = vshrl.u32 %v2886, 7
  %v2888 = vsub.s32 0, %v2887
  %v2889 = vrot.slane %v2636, %v2888
  %v2891 = vcombine.high %v2889, %v2889
  %v2893 = vadd.f32 %v2877, %v2889
  %v2894 = vadd.f32 %v2878, %v2891
  %v2895 = vadd.f32 %v2879, %v2889
  %v2896 = vadd.f32 %v2880, %v2891
  %v2897 = vadd.f32 %v2881, %v2889
  %v2898 = vadd.f32 %v2882, %v2891
  %v2899 = vadd.f32 %v2883, %v2889
  %v2900 = vadd.f32 %v2884, %v2891
  %v2901 = vld [vmem:[%s16] sm:$0xff]
  %v2902 = vld [vmem:[%s16 + $0x8] sm:$0xff]
  %v2905 = vcombine.high %v2901, %v2901
  %v2906 = vcombine.high %v2902, %v2902
  %v2909 = vmul.f32 %v2893, %v2901
  %v2910 = vmul.f32 %v2894, %v2905
  %v2911 = vmul.f32 %v2895, %v2902
  %v2912 = vmul.f32 %v2896, %v2906
  %v2913 = vmul.f32 %v2897, %v2901
  %v2914 = vmul.f32 %v2898, %v2905
  %v2915 = vmul.f32 %v2899, %v2902
  %v2916 = vmul.f32 %v2900, %v2906
  %v2925 = vcombine.low %v2909, %v2910
  %v2926 = vcombine.low %v2911, %v2912
  %v2927 = vcombine.low %v2913, %v2914
  %v2928 = vcombine.low %v2915, %v2916
  %v2933 = vsel %vm221, %v2925, 0.0
  %2934 = vadd.xlane.f32.xlu0 %v2933
  %v2935 = vpop.xlane.xlu0 %2934
  %v2936 = vsel %vm221, %v2926, 0.0
  %2937 = vadd.xlane.f32.xlu0 %v2936
  %v2938 = vpop.xlane.xlu0 %2937
  %v2939 = vsel %vm221, %v2927, 0.0
  %2940 = vadd.xlane.f32.xlu0 %v2939
  %v2941 = vpop.xlane.xlu0 %2940
  %v2942 = vsel %vm221, %v2928, 0.0
  %2943 = vadd.xlane.f32.xlu0 %v2942
  %v2944 = vpop.xlane.xlu0 %2943
  %v2949 = vlaneseq
  %v2950 = vand.u32 %v2949, 127
  %v2951 = vlaneseq
  %v2952 = vshrl.u32 %v2951, 7
  %v2953 = vsub.s32 %v2950, %v2952
  %v2954 = vrot.slane %v2935, %v2953
  %v2955 = vadd.s32 %v2950, 4294967288
  %v2956 = vlaneseq
  %v2957 = vshrl.u32 %v2956, 7
  %v2958 = vsub.s32 %v2955, %v2957
  %v2959 = vrot.slane %v2938, %v2958
  %vm2960 = vcmask 130112
  %v2961 = vsel %vm2960, %v2959, %v2954
  %v2962 = vlaneseq
  %v2963 = vshrl.u32 %v2962, 7
  %v2964 = vsub.s32 %v2950, %v2963
  %v2965 = vrot.slane %v2941, %v2964
  %v2966 = vlaneseq
  %v2967 = vshrl.u32 %v2966, 7
  %v2968 = vsub.s32 %v2955, %v2967
  %v2969 = vrot.slane %v2944, %v2968
  %v2970 = vsel %vm2960, %v2969, %v2965
  %v2971 = vsel %vm1972, %v2970, %v2961
  %vm2973 = vcmask 123904
  %v2974 = vsel %vm2973, %v2971, 0.0
  %2975 = vadd.xlane.f32.xlu0 %v2974
  %v2976 = vpop.xlane.xlu0 %2975
  %v2977 = vld [vmem:[#allocation2] sm:$0x1]
  %v2979 = vlaneseq
  %v2980 = vshrl.u32 %v2979, 7
  %v2981 = vsub.s32 0, %v2980
  %v2982 = vrot.slane %v2977, %v2981
  %v2984 = vadd.f32 %v2976, %v2982
  %v2985 = vxor.u32 %v2984, 2147483648
  %v2986 = vmul.f32 %v2985, 1.442695
  %v2987 = vpow.pop %v2986
  %v2988 = vadd.f32 %v2987, 1.0
  %v2989 = vrcp.pop %v2988
  %v2990 = vmul.f32 1.0, %v2989
  %vm2991 = vcmask 1024
  %2992 = vst.msk [vmem:[%s18] sm:$0x3] %vm2991, %v2990
  // Predicated region
  $region74: #{patchtst_forward.1} parent=0 // pred_check
    _
  $region75: #{patchtst_forward.1} parent=0 // pred_check_branch
    %2994 = sbr.rel (0) target = $region77
  $region76: #{patchtst_forward.1} parent=0 // pred_region
    _
  $region77: #{patchtst_forward.1} parent=0 // pred_fallthru
    _
  // Predicated region
  $region78: #{patchtst_forward.1} parent=0 // pred_check
    _
  $region79: #{patchtst_forward.1} parent=0 // pred_check_branch
    %2996 = sbr.rel (0) target = $region81
  $region80: #{patchtst_forward.1} parent=0 // pred_region
    _
  $region81: #{patchtst_forward.1} parent=0 // pred_fallthru
    _

</llo_original>
